<compile_context>
chip_gen: v7x
topology: tpu7x:2x2x1
jax: 0.10.0
libtpu: 0.0.40
codegen_flags: <defaults>
</compile_context>

<pallas_src>
import functools

import numpy as np

import jax
import jax.numpy as jnp
from jax import lax
from jax.experimental import pallas as pl
from jax.experimental.pallas import tpu as pltpu

BN_EPS = 1e-5


# ------------------------------ Pallas kernel ------------------------------ #

def _fused_cnn_kernel(*refs, dims, hf):
    """Whole SimpleCNN forward (eval mode) for one batch tile, all in VMEM.

    refs = (x, [up_mask, dn_mask, m, shift] * n_blocks, sel, w1, b1, w2, b2, out)
      x       : (R, 128)  f32     input tile, rows=(b,h), lanes=(w,c), R = TB*H0
      up_mask : (R, 1)    f32     0 where the conv's "up" tap crosses the image top
      dn_mask : (R, 1)    f32     0 where the conv's "down" tap crosses the image bottom
      m       : (3K, W*Cout) bf16 fused banded conv weights ([up|center|down] taps,
                                  im2col, dead-column skipping and BN scale folded in)
      shift   : (1, W*Cout) f32   folded conv-bias/BN shift, tiled over w
      sel     : (Hf, TB, R) bf16  0/1 row selections for the head flatten
      w1      : (Hf, 128, HIDp) bf16  head weight (NCHW flatten + dead cols folded in)
    dims = tuple of (W_out, C_out, live_row_stride) per conv block (static).

    Rows/columns made dead by the 2x2 pools are never compacted: the next block's
    banded weights and the head weights simply have zero rows there.
    """
    nblk = len(dims)
    x_ref = refs[0]
    sel_ref, w1_ref, b1_ref, w2_ref, b2_ref, o_ref = refs[1 + 4 * nblk:]

    act = x_ref[...]                                      # (R, 128) f32
    R = act.shape[0]
    for i, (w_out, c_out, s) in enumerate(dims):
        um_ref, dm_ref, m_ref, sh_ref = refs[1 + 4 * i: 5 + 4 * i]

        # ---- 3x3 SAME conv: ONE fat-K MXU matmul over [up | center | down]. ----
        up = pltpu.roll(act, shift=s, axis=0) * um_ref[...]
        dn = pltpu.roll(act, shift=R - s, axis=0) * dm_ref[...]
        cat = jnp.concatenate([up, act, dn], axis=1).astype(jnp.bfloat16)
        y = jnp.dot(cat, m_ref[...], preferred_element_type=jnp.float32)

        # ---- folded BN/bias shift (scale already inside m), then ReLU. ----------
        y = jnp.maximum(y + sh_ref[...], 0.0)             # (R, W*Cout)

        # ---- 2x2 max-pool, no compaction (dead rows/cols just stay dead). -------
        wc = w_out * c_out
        wp = jnp.maximum(y, pltpu.roll(y, shift=wc - c_out, axis=1))   # width pairs
        act = jnp.maximum(wp, pltpu.roll(wp, shift=R - s, axis=0))     # height pairs

    # ---- classifier head: flatten folded into sel/w1; dropout = eval identity. --
    act16 = act.astype(jnp.bfloat16)
    acc = None
    for r in range(hf):                                   # Hf is tiny (static unroll)
        rows = jnp.dot(sel_ref[r], act16, preferred_element_type=jnp.float32)
        part = jnp.dot(rows.astype(jnp.bfloat16), w1_ref[r],
                       preferred_element_type=jnp.float32)
        acc = part if acc is None else acc + part
    hidden = jnp.maximum(acc + b1_ref[...], 0.0)          # (TB, HIDp)
    o_ref[...] = (jnp.dot(hidden.astype(jnp.bfloat16), w2_ref[...],
                          preferred_element_type=jnp.float32) + b2_ref[...])


# -------------------------------- wrapper ----------------------------------- #

def _const_spec(a):
    zeros = (0,) * a.ndim
    return pl.BlockSpec(a.shape, lambda b, _z=zeros: _z)


def simple_cnn_forward(x_nchw, params):
    """Single fused pallas_call; one grid step per batch tile ("parallel" on v7x)."""
    B, C0, H0, W0 = x_nchw.shape
    blocks = params["blocks"]
    nblk = len(blocks)

    # Static per-block dims: (output width, output channels, live-row stride).
    dims, w, s = [], W0, 1
    for blk in blocks:
        dims.append((w, blk["shift_w"].shape[1] // w, s))
        w, s = w // 2, s * 2
    hf = H0 // (2 ** nblk)                        # live rows per image at the head
    c0pad = blocks[0]["m"].shape[0] // (3 * W0)   # zero-padded input channels
    ncls = params["w2"].shape[1]

    # Lane-dense input slab: NHWC with channels zero-padded so W0*c0pad is 128-dense.
    x_nhwc = jnp.transpose(x_nchw, (0, 2, 3, 1))
    if c0pad > C0:
        x_nhwc = jnp.pad(x_nhwc, ((0, 0), (0, 0), (0, 0), (0, c0pad - C0)))
    x2d = x_nhwc.reshape(B * H0, W0 * c0pad)

    # Batch tile: per-step footprint is tiny (<2 MiB), safe on v7x's 64 MiB VMEM.
    TB = 8 if B % 8 == 0 else B
    R = TB * H0

    # Precomputed per-block boundary masks + head row selections (constants under jit).
    row = np.arange(R) % H0
    up_masks, dn_masks, stride = [], [], 1
    for _ in range(nblk):
        up_masks.append(jnp.asarray((row >= stride).astype(np.float32)[:, None]))
        dn_masks.append(jnp.asarray((row < H0 - stride).astype(np.float32)[:, None]))
        stride *= 2
    sel_np = np.zeros((hf, TB, R), np.float32)
    for r in range(hf):
        for bb in range(TB):
            sel_np[r, bb, bb * H0 + r * (2 ** nblk)] = 1.0
    sel = jnp.asarray(sel_np, jnp.bfloat16)

    args = [x2d]
    in_specs = [pl.BlockSpec((R, W0 * c0pad), lambda b: (b, 0))]
    for i, blk in enumerate(blocks):
        for a in (up_masks[i], dn_masks[i], blk["m"], blk["shift_w"]):
            args.append(a)
            in_specs.append(_const_spec(a))
    for a in (sel, params["w1p"], params["b1"], params["w2"], params["b2"]):
        args.append(a)
        in_specs.append(_const_spec(a))

    kernel = functools.partial(_fused_cnn_kernel, dims=tuple(dims), hf=hf)
    return pl.pallas_call(
        kernel,
        grid=(B // TB,),
        in_specs=in_specs,
        out_specs=pl.BlockSpec((TB, ncls), lambda b: (b, 0)),
        out_shape=jax.ShapeDtypeStruct((B, ncls), jnp.float32),
        compiler_params=pltpu.CompilerParams(
            dimension_semantics=("parallel",),
            vmem_limit_bytes=32 * 1024 * 1024),
    )(*args)


# ------------------------- parameter preparation ---------------------------- #

def init_params(key, in_channels, conv_channels, linear_hidden, num_classes,
                image_size):
    """Raw (PyTorch-like) parameters: conv weights, BN stats, linear weights."""
    blocks = []
    c_in = in_channels
    h, w = image_size
    for c_out in conv_channels:
        key, k1, k2, k3, k4, k5, k6 = jax.random.split(key, 7)
        w_oihw = 0.1 * jax.random.normal(k1, (c_out, c_in, 3, 3), jnp.float32)
        bias = 0.05 * jax.random.normal(k2, (c_out,), jnp.float32)
        gamma = 1.0 + 0.1 * jax.random.normal(k3, (c_out,), jnp.float32)
        beta = 0.1 * jax.random.normal(k4, (c_out,), jnp.float32)
        mean = 0.1 * jax.random.normal(k5, (c_out,), jnp.float32)
        var = 0.8 + jnp.abs(0.2 * jax.random.normal(k6, (c_out,), jnp.float32))
        scale = gamma / jnp.sqrt(var + BN_EPS)
        shift = beta + (bias - mean) * scale
        blocks.append(dict(
            w_hwio=jnp.transpose(w_oihw, (2, 3, 1, 0)),      # (3,3,Cin,Cout)
            bias=bias, gamma=gamma, beta=beta, mean=mean, var=var,
            scale=scale, shift=shift,
        ))
        c_in = c_out
        h, w = h // 2, w // 2

    flatten_dim = c_in * h * w
    key, k1, k2, k3, k4 = jax.random.split(key, 5)
    w1 = 0.05 * jax.random.normal(k1, (flatten_dim, linear_hidden), jnp.float32)
    b1 = 0.05 * jax.random.normal(k2, (linear_hidden,), jnp.float32)
    w2 = 0.1 * jax.random.normal(k3, (linear_hidden, num_classes), jnp.float32)
    b2 = 0.05 * jax.random.normal(k4, (num_classes,), jnp.float32)
    return dict(blocks=blocks, w1=w1, b1=b1, w2=w2, b2=b2)


def prepare_fused_params(raw, in_channels, image_size):
    """One-time (init) folding of the raw weights into the fused-kernel format."""
    h0, w0 = image_size
    c0 = in_channels
    # pad input channels so the first conv's K and the input slab are 128-lane-dense
    c0pad = c0
    if (w0 * c0) % 128 != 0 and 128 % w0 == 0:
        c0pad = max(c0, (-(-(w0 * c0) // 128) * 128) // w0)

    blocks = []
    c_in, win_space, wstride, w = c0pad, w0, 1, w0
    for blk in raw["blocks"]:
        K = np.asarray(blk["w_hwio"], np.float32)            # (3, 3, Cin, Cout)
        cin_real, c_out = K.shape[2], K.shape[3]
        m = np.zeros((3, win_space, c_in, w, c_out), np.float32)
        for kh in range(3):
            for kw in range(3):
                for wo in range(w):
                    wi = wo + kw - 1
                    if 0 <= wi < w:                           # SAME width padding
                        m[kh, wi * wstride, :cin_real, wo, :] = K[kh, kw]
        if wstride == 2:                                      # dead-column rows stay 0
            assert not np.any(m[:, 1::2]), "dead pooled columns must map to zero rows"
        scale = np.asarray(blk["scale"], np.float32)
        shift = np.asarray(blk["shift"], np.float32)
        m = m * scale[None, None, None, None, :]              # fold BN scale into weights
        blocks.append(dict(
            m=jnp.asarray(m.reshape(3 * win_space * c_in, w * c_out), jnp.bfloat16),
            shift_w=jnp.asarray(np.tile(shift, w)[None, :], jnp.float32),
        ))
        # next block reads this block's width-pooled slab: all `w` groups kept,
        # live groups at even indices (stride 2)
        c_in, win_space, wstride, w = c_out, w, 2, w // 2

    # classifier head: NCHW flatten order, dead columns and hidden padding folded in
    nblk = len(raw["blocks"])
    hf, wf = h0 // (2 ** nblk), w
    hidden = raw["w1"].shape[1]
    hid_pad = -(-hidden // 128) * 128
    w1_np = np.asarray(raw["w1"], np.float32)                 # rows = NCHW flatten
    assert w1_np.shape[0] == c_in * hf * wf
    w1p = np.zeros((hf, win_space * c_in, hid_pad), np.float32)
    for r in range(hf):
        for wcol in range(wf):
            g = wcol * wstride                                # live width group
            for ch in range(c_in):
                w1p[r, g * c_in + ch, :hidden] = w1_np[ch * hf * wf + r * wf + wcol, :]
    w2_np = np.asarray(raw["w2"], np.float32)
    w2p = np.zeros((hid_pad, w2_np.shape[1]), np.float32)
    w2p[:hidden, :] = w2_np
    b1p = np.zeros((1, hid_pad), np.float32)
    b1p[0, :hidden] = np.asarray(raw["b1"], np.float32)
    return dict(
        blocks=blocks,
        w1p=jnp.asarray(w1p, jnp.bfloat16),
        b1=jnp.asarray(b1p, jnp.float32),
        w2=jnp.asarray(w2p, jnp.bfloat16),
        b2=jnp.asarray(raw["b2"], jnp.float32).reshape(1, -1),
    )


# ------------------------------ pure-JAX reference --------------------------- #

def max_pool_2x2(x_nhwc):
    B, H, W, C = x_nhwc.shape
    return x_nhwc.reshape(B, H // 2, 2, W // 2, 2, C).max(axis=(2, 4))


def reference_forward(x_nchw, params):
    """Pure-JAX reference with identical (eval-mode) semantics, HIGHEST precision."""
    x = jnp.transpose(x_nchw, (0, 2, 3, 1))
    for blk in params["blocks"]:
        y = lax.conv_general_dilated(
            x, blk["w_hwio"], window_strides=(1, 1), padding="SAME",
            dimension_numbers=("NHWC", "HWIO", "NHWC"),
            precision=lax.Precision.HIGHEST)
        y = y + blk["bias"]
        y = (y - blk["mean"]) / jnp.sqrt(blk["var"] + BN_EPS) * blk["gamma"] + blk["beta"]
        y = jnp.maximum(y, 0.0)
        x = max_pool_2x2(y)
    B = x.shape[0]
    x = jnp.transpose(x, (0, 3, 1, 2)).reshape(B, -1)          # NCHW flatten
    h = jnp.maximum(
        jnp.dot(x, params["w1"], precision=lax.Precision.HIGHEST) + params["b1"], 0.0)
    return jnp.dot(h, params["w2"], precision=lax.Precision.HIGHEST) + params["b2"]


# ----------------------------------- main ------------------------------------ #

if __name__ == "__main__":
    B, C_IN, H, W = 2, 4, 16, 16
    CONV_CHANNELS = (8, 16, 32)
    LINEAR_HIDDEN = 32
    NUM_CLASSES = 10

    root = jax.random.PRNGKey(0)
    pkey, xkey = jax.random.split(root)
    raw = init_params(pkey, C_IN, CONV_CHANNELS, LINEAR_HIDDEN, NUM_CLASSES, (H, W))
    fused = prepare_fused_params(raw, C_IN, (H, W))
    x = jax.random.normal(xkey, (B, C_IN, H, W), jnp.float32)

    out = jax.jit(simple_cnn_forward)(x, fused)
    out = jax.block_until_ready(out)

    assert out.shape == (B, NUM_CLASSES), out.shape
    ref = reference_forward(x, raw)
    err = float(jnp.max(jnp.abs(out - ref)))
    # kernel matmuls use bf16 operands / f32 accumulation (MXU) vs HIGHEST-precision
    # f32 in the reference, hence the loose tolerance.
    if not jnp.allclose(out, ref, atol=3e-2, rtol=3e-2):
        raise AssertionError(f"mismatch vs reference: max abs err = {err}")

    print("KERNEL_OK")
</pallas_src>

<mosaic_0001>
module attributes {stable_mosaic.version = 11 : i64} {
  func.func @_fused_cnn_kernel(%arg0: i32, %arg1: memref<32x128xf32, #tpu.memory_space<vmem>>, %arg2: memref<32x1xf32, #tpu.memory_space<vmem>>, %arg3: memref<32x1xf32, #tpu.memory_space<vmem>>, %arg4: memref<384x128xbf16, #tpu.memory_space<vmem>>, %arg5: memref<1x128xf32, #tpu.memory_space<vmem>>, %arg6: memref<32x1xf32, #tpu.memory_space<vmem>>, %arg7: memref<32x1xf32, #tpu.memory_space<vmem>>, %arg8: memref<384x128xbf16, #tpu.memory_space<vmem>>, %arg9: memref<1x128xf32, #tpu.memory_space<vmem>>, %arg10: memref<32x1xf32, #tpu.memory_space<vmem>>, %arg11: memref<32x1xf32, #tpu.memory_space<vmem>>, %arg12: memref<384x128xbf16, #tpu.memory_space<vmem>>, %arg13: memref<1x128xf32, #tpu.memory_space<vmem>>, %arg14: memref<2x2x32xbf16, #tpu.memory_space<vmem>>, %arg15: memref<2x128x128xbf16, #tpu.memory_space<vmem>>, %arg16: memref<1x128xf32, #tpu.memory_space<vmem>>, %arg17: memref<128x10xbf16, #tpu.memory_space<vmem>>, %arg18: memref<1x10xf32, #tpu.memory_space<vmem>>, %arg19: memref<2x10xf32, #tpu.memory_space<vmem>>) attributes {dimension_semantics = [#tpu.dimension_semantics<parallel>], iteration_bounds = array<i64: 1>, scalar_prefetch = 0 : i64, scratch_operands = 0 : i64, tpu.core_type = #tpu.core_type<tc>, window_params = [{transform_indices = @transform_0, window_bounds = array<i64: 32, 128>}, {pipeline_mode = #tpu.pipeline_mode<synchronous>, transform_indices = @transform_1, window_bounds = array<i64: 32, 1>}, {pipeline_mode = #tpu.pipeline_mode<synchronous>, transform_indices = @transform_2, window_bounds = array<i64: 32, 1>}, {pipeline_mode = #tpu.pipeline_mode<synchronous>, transform_indices = @transform_3, window_bounds = array<i64: 384, 128>}, {pipeline_mode = #tpu.pipeline_mode<synchronous>, transform_indices = @transform_4, window_bounds = array<i64: 1, 128>}, {pipeline_mode = #tpu.pipeline_mode<synchronous>, transform_indices = @transform_5, window_bounds = array<i64: 32, 1>}, {pipeline_mode = #tpu.pipeline_mode<synchronous>, transform_indices = @transform_6, window_bounds = array<i64: 32, 1>}, {pipeline_mode = #tpu.pipeline_mode<synchronous>, transform_indices = @transform_7, window_bounds = array<i64: 384, 128>}, {pipeline_mode = #tpu.pipeline_mode<synchronous>, transform_indices = @transform_8, window_bounds = array<i64: 1, 128>}, {pipeline_mode = #tpu.pipeline_mode<synchronous>, transform_indices = @transform_9, window_bounds = array<i64: 32, 1>}, {pipeline_mode = #tpu.pipeline_mode<synchronous>, transform_indices = @transform_10, window_bounds = array<i64: 32, 1>}, {pipeline_mode = #tpu.pipeline_mode<synchronous>, transform_indices = @transform_11, window_bounds = array<i64: 384, 128>}, {pipeline_mode = #tpu.pipeline_mode<synchronous>, transform_indices = @transform_12, window_bounds = array<i64: 1, 128>}, {pipeline_mode = #tpu.pipeline_mode<synchronous>, transform_indices = @transform_13, window_bounds = array<i64: 2, 2, 32>}, {pipeline_mode = #tpu.pipeline_mode<synchronous>, transform_indices = @transform_14, window_bounds = array<i64: 2, 128, 128>}, {pipeline_mode = #tpu.pipeline_mode<synchronous>, transform_indices = @transform_15, window_bounds = array<i64: 1, 128>}, {pipeline_mode = #tpu.pipeline_mode<synchronous>, transform_indices = @transform_16, window_bounds = array<i64: 128, 10>}, {pipeline_mode = #tpu.pipeline_mode<synchronous>, transform_indices = @transform_17, window_bounds = array<i64: 1, 10>}, {transform_indices = @transform_18, window_bounds = array<i64: 2, 10>}]} {
    %c0 = arith.constant 0 : index
    %c0_0 = arith.constant 0 : index
    %0 = vector.load %arg1[%c0, %c0_0] : memref<32x128xf32, #tpu.memory_space<vmem>>, vector<32x128xf32>
    %c1_i32 = arith.constant 1 : i32
    %1 = tpu.dynamic_rotate %0 by %c1_i32 dim 0 : vector<32x128xf32>, i32 -> vector<32x128xf32>
    %c0_1 = arith.constant 0 : index
    %c0_2 = arith.constant 0 : index
    %2 = vector.load %arg2[%c0_1, %c0_2] : memref<32x1xf32, #tpu.memory_space<vmem>>, vector<32x1xf32>
    %3 = vector.broadcast %2 : vector<32x1xf32> to vector<32x128xf32>
    %4 = arith.mulf %1, %3 : vector<32x128xf32>
    %c31_i32 = arith.constant 31 : i32
    %5 = tpu.dynamic_rotate %0 by %c31_i32 dim 0 : vector<32x128xf32>, i32 -> vector<32x128xf32>
    %c0_3 = arith.constant 0 : index
    %c0_4 = arith.constant 0 : index
    %6 = vector.load %arg3[%c0_3, %c0_4] : memref<32x1xf32, #tpu.memory_space<vmem>>, vector<32x1xf32>
    %7 = vector.broadcast %6 : vector<32x1xf32> to vector<32x128xf32>
    %8 = arith.mulf %5, %7 : vector<32x128xf32>
    %9 = tpu.concatenate %4, %0, %8 in 1 : vector<32x128xf32>, vector<32x128xf32>, vector<32x128xf32> -> vector<32x384xf32>
    %10 = arith.truncf %9 : vector<32x384xf32> to vector<32x384xbf16>
    %c0_5 = arith.constant 0 : index
    %c0_6 = arith.constant 0 : index
    %11 = vector.load %arg4[%c0_5, %c0_6] : memref<384x128xbf16, #tpu.memory_space<vmem>>, vector<384x128xbf16>
    %cst = arith.constant dense<0.000000e+00> : vector<32x128xf32>
    %12 = tpu.matmul %10, %11, %cst {dimension_numbers = #tpu.dot_dimension_numbers<[1], [0], [0], [1], [0, 0, 1, 1], [], []>} : vector<32x384xbf16>, vector<384x128xbf16>, vector<32x128xf32> -> vector<32x128xf32>
    %c0_7 = arith.constant 0 : index
    %c0_8 = arith.constant 0 : index
    %13 = vector.load %arg5[%c0_7, %c0_8] : memref<1x128xf32, #tpu.memory_space<vmem>>, vector<1x128xf32>
    %14 = vector.broadcast %13 : vector<1x128xf32> to vector<32x128xf32>
    %15 = arith.addf %12, %14 : vector<32x128xf32>
    %cst_9 = arith.constant 0.000000e+00 : f32
    %16 = vector.broadcast %cst_9 : f32 to vector<32x128xf32>
    %17 = arith.maximumf %15, %16 : vector<32x128xf32>
    %c120_i32 = arith.constant 120 : i32
    %18 = tpu.dynamic_rotate %17 by %c120_i32 dim 1 : vector<32x128xf32>, i32 -> vector<32x128xf32>
    %19 = arith.maximumf %17, %18 : vector<32x128xf32>
    %c31_i32_10 = arith.constant 31 : i32
    %20 = tpu.dynamic_rotate %19 by %c31_i32_10 dim 0 : vector<32x128xf32>, i32 -> vector<32x128xf32>
    %21 = arith.maximumf %19, %20 : vector<32x128xf32>
    %c2_i32 = arith.constant 2 : i32
    %22 = tpu.dynamic_rotate %21 by %c2_i32 dim 0 : vector<32x128xf32>, i32 -> vector<32x128xf32>
    %c0_11 = arith.constant 0 : index
    %c0_12 = arith.constant 0 : index
    %23 = vector.load %arg6[%c0_11, %c0_12] : memref<32x1xf32, #tpu.memory_space<vmem>>, vector<32x1xf32>
    %24 = vector.broadcast %23 : vector<32x1xf32> to vector<32x128xf32>
    %25 = arith.mulf %22, %24 : vector<32x128xf32>
    %c30_i32 = arith.constant 30 : i32
    %26 = tpu.dynamic_rotate %21 by %c30_i32 dim 0 : vector<32x128xf32>, i32 -> vector<32x128xf32>
    %c0_13 = arith.constant 0 : index
    %c0_14 = arith.constant 0 : index
    %27 = vector.load %arg7[%c0_13, %c0_14] : memref<32x1xf32, #tpu.memory_space<vmem>>, vector<32x1xf32>
    %28 = vector.broadcast %27 : vector<32x1xf32> to vector<32x128xf32>
    %29 = arith.mulf %26, %28 : vector<32x128xf32>
    %30 = tpu.concatenate %25, %21, %29 in 1 : vector<32x128xf32>, vector<32x128xf32>, vector<32x128xf32> -> vector<32x384xf32>
    %31 = arith.truncf %30 : vector<32x384xf32> to vector<32x384xbf16>
    %c0_15 = arith.constant 0 : index
    %c0_16 = arith.constant 0 : index
    %32 = vector.load %arg8[%c0_15, %c0_16] : memref<384x128xbf16, #tpu.memory_space<vmem>>, vector<384x128xbf16>
    %cst_17 = arith.constant dense<0.000000e+00> : vector<32x128xf32>
    %33 = tpu.matmul %31, %32, %cst_17 {dimension_numbers = #tpu.dot_dimension_numbers<[1], [0], [0], [1], [0, 0, 1, 1], [], []>} : vector<32x384xbf16>, vector<384x128xbf16>, vector<32x128xf32> -> vector<32x128xf32>
    %c0_18 = arith.constant 0 : index
    %c0_19 = arith.constant 0 : index
    %34 = vector.load %arg9[%c0_18, %c0_19] : memref<1x128xf32, #tpu.memory_space<vmem>>, vector<1x128xf32>
    %35 = vector.broadcast %34 : vector<1x128xf32> to vector<32x128xf32>
    %36 = arith.addf %33, %35 : vector<32x128xf32>
    %cst_20 = arith.constant 0.000000e+00 : f32
    %37 = vector.broadcast %cst_20 : f32 to vector<32x128xf32>
    %38 = arith.maximumf %36, %37 : vector<32x128xf32>
    %c112_i32 = arith.constant 112 : i32
    %39 = tpu.dynamic_rotate %38 by %c112_i32 dim 1 : vector<32x128xf32>, i32 -> vector<32x128xf32>
    %40 = arith.maximumf %38, %39 : vector<32x128xf32>
    %c30_i32_21 = arith.constant 30 : i32
    %41 = tpu.dynamic_rotate %40 by %c30_i32_21 dim 0 : vector<32x128xf32>, i32 -> vector<32x128xf32>
    %42 = arith.maximumf %40, %41 : vector<32x128xf32>
    %c4_i32 = arith.constant 4 : i32
    %43 = tpu.dynamic_rotate %42 by %c4_i32 dim 0 : vector<32x128xf32>, i32 -> vector<32x128xf32>
    %c0_22 = arith.constant 0 : index
    %c0_23 = arith.constant 0 : index
    %44 = vector.load %arg10[%c0_22, %c0_23] : memref<32x1xf32, #tpu.memory_space<vmem>>, vector<32x1xf32>
    %45 = vector.broadcast %44 : vector<32x1xf32> to vector<32x128xf32>
    %46 = arith.mulf %43, %45 : vector<32x128xf32>
    %c28_i32 = arith.constant 28 : i32
    %47 = tpu.dynamic_rotate %42 by %c28_i32 dim 0 : vector<32x128xf32>, i32 -> vector<32x128xf32>
    %c0_24 = arith.constant 0 : index
    %c0_25 = arith.constant 0 : index
    %48 = vector.load %arg11[%c0_24, %c0_25] : memref<32x1xf32, #tpu.memory_space<vmem>>, vector<32x1xf32>
    %49 = vector.broadcast %48 : vector<32x1xf32> to vector<32x128xf32>
    %50 = arith.mulf %47, %49 : vector<32x128xf32>
    %51 = tpu.concatenate %46, %42, %50 in 1 : vector<32x128xf32>, vector<32x128xf32>, vector<32x128xf32> -> vector<32x384xf32>
    %52 = arith.truncf %51 : vector<32x384xf32> to vector<32x384xbf16>
    %c0_26 = arith.constant 0 : index
    %c0_27 = arith.constant 0 : index
    %53 = vector.load %arg12[%c0_26, %c0_27] : memref<384x128xbf16, #tpu.memory_space<vmem>>, vector<384x128xbf16>
    %cst_28 = arith.constant dense<0.000000e+00> : vector<32x128xf32>
    %54 = tpu.matmul %52, %53, %cst_28 {dimension_numbers = #tpu.dot_dimension_numbers<[1], [0], [0], [1], [0, 0, 1, 1], [], []>} : vector<32x384xbf16>, vector<384x128xbf16>, vector<32x128xf32> -> vector<32x128xf32>
    %c0_29 = arith.constant 0 : index
    %c0_30 = arith.constant 0 : index
    %55 = vector.load %arg13[%c0_29, %c0_30] : memref<1x128xf32, #tpu.memory_space<vmem>>, vector<1x128xf32>
    %56 = vector.broadcast %55 : vector<1x128xf32> to vector<32x128xf32>
    %57 = arith.addf %54, %56 : vector<32x128xf32>
    %cst_31 = arith.constant 0.000000e+00 : f32
    %58 = vector.broadcast %cst_31 : f32 to vector<32x128xf32>
    %59 = arith.maximumf %57, %58 : vector<32x128xf32>
    %c96_i32 = arith.constant 96 : i32
    %60 = tpu.dynamic_rotate %59 by %c96_i32 dim 1 : vector<32x128xf32>, i32 -> vector<32x128xf32>
    %61 = arith.maximumf %59, %60 : vector<32x128xf32>
    %c28_i32_32 = arith.constant 28 : i32
    %62 = tpu.dynamic_rotate %61 by %c28_i32_32 dim 0 : vector<32x128xf32>, i32 -> vector<32x128xf32>
    %63 = arith.maximumf %61, %62 : vector<32x128xf32>
    %64 = arith.truncf %63 : vector<32x128xf32> to vector<32x128xbf16>
    %c0_33 = arith.constant 0 : index
    %c0_34 = arith.constant 0 : index
    %c0_35 = arith.constant 0 : index
    %65 = vector.load %arg14[%c0_33, %c0_34, %c0_35] : memref<2x2x32xbf16, #tpu.memory_space<vmem>>, vector<1x2x32xbf16>
    %66 = vector.shape_cast %65 : vector<1x2x32xbf16> to vector<2x32xbf16>
    %cst_36 = arith.constant dense<0.000000e+00> : vector<2x128xf32>
    %67 = tpu.matmul %66, %64, %cst_36 {dimension_numbers = #tpu.dot_dimension_numbers<[1], [0], [0], [1], [0, 0, 1, 1], [], []>} : vector<2x32xbf16>, vector<32x128xbf16>, vector<2x128xf32> -> vector<2x128xf32>
    %68 = arith.truncf %67 : vector<2x128xf32> to vector<2x128xbf16>
    %c0_37 = arith.constant 0 : index
    %c0_38 = arith.constant 0 : index
    %c0_39 = arith.constant 0 : index
    %69 = vector.load %arg15[%c0_37, %c0_38, %c0_39] : memref<2x128x128xbf16, #tpu.memory_space<vmem>>, vector<1x128x128xbf16>
    %70 = vector.shape_cast %69 : vector<1x128x128xbf16> to vector<128x128xbf16>
    %cst_40 = arith.constant dense<0.000000e+00> : vector<2x128xf32>
    %71 = tpu.matmul %68, %70, %cst_40 {dimension_numbers = #tpu.dot_dimension_numbers<[1], [0], [0], [1], [0, 0, 1, 1], [], []>} : vector<2x128xbf16>, vector<128x128xbf16>, vector<2x128xf32> -> vector<2x128xf32>
    %c1 = arith.constant 1 : index
    %c0_41 = arith.constant 0 : index
    %c0_42 = arith.constant 0 : index
    %72 = vector.load %arg14[%c1, %c0_41, %c0_42] : memref<2x2x32xbf16, #tpu.memory_space<vmem>>, vector<1x2x32xbf16>
    %73 = vector.shape_cast %72 : vector<1x2x32xbf16> to vector<2x32xbf16>
    %cst_43 = arith.constant dense<0.000000e+00> : vector<2x128xf32>
    %74 = tpu.matmul %73, %64, %cst_43 {dimension_numbers = #tpu.dot_dimension_numbers<[1], [0], [0], [1], [0, 0, 1, 1], [], []>} : vector<2x32xbf16>, vector<32x128xbf16>, vector<2x128xf32> -> vector<2x128xf32>
    %75 = arith.truncf %74 : vector<2x128xf32> to vector<2x128xbf16>
    %c1_44 = arith.constant 1 : index
    %c0_45 = arith.constant 0 : index
    %c0_46 = arith.constant 0 : index
    %76 = vector.load %arg15[%c1_44, %c0_45, %c0_46] : memref<2x128x128xbf16, #tpu.memory_space<vmem>>, vector<1x128x128xbf16>
    %77 = vector.shape_cast %76 : vector<1x128x128xbf16> to vector<128x128xbf16>
    %cst_47 = arith.constant dense<0.000000e+00> : vector<2x128xf32>
    %78 = tpu.matmul %75, %77, %cst_47 {dimension_numbers = #tpu.dot_dimension_numbers<[1], [0], [0], [1], [0, 0, 1, 1], [], []>} : vector<2x128xbf16>, vector<128x128xbf16>, vector<2x128xf32> -> vector<2x128xf32>
    %79 = arith.addf %71, %78 : vector<2x128xf32>
    %c0_48 = arith.constant 0 : index
    %c0_49 = arith.constant 0 : index
    %80 = vector.load %arg16[%c0_48, %c0_49] : memref<1x128xf32, #tpu.memory_space<vmem>>, vector<1x128xf32>
    %81 = vector.broadcast %80 : vector<1x128xf32> to vector<2x128xf32>
    %82 = arith.addf %79, %81 : vector<2x128xf32>
    %cst_50 = arith.constant 0.000000e+00 : f32
    %83 = vector.broadcast %cst_50 : f32 to vector<2x128xf32>
    %84 = arith.maximumf %82, %83 : vector<2x128xf32>
    %85 = arith.truncf %84 : vector<2x128xf32> to vector<2x128xbf16>
    %c0_51 = arith.constant 0 : index
    %c0_52 = arith.constant 0 : index
    %86 = vector.load %arg17[%c0_51, %c0_52] : memref<128x10xbf16, #tpu.memory_space<vmem>>, vector<128x10xbf16>
    %cst_53 = arith.constant dense<0.000000e+00> : vector<2x10xf32>
    %87 = tpu.matmul %85, %86, %cst_53 {dimension_numbers = #tpu.dot_dimension_numbers<[1], [0], [0], [1], [0, 0, 1, 1], [], []>} : vector<2x128xbf16>, vector<128x10xbf16>, vector<2x10xf32> -> vector<2x10xf32>
    %c0_54 = arith.constant 0 : index
    %c0_55 = arith.constant 0 : index
    %88 = vector.load %arg18[%c0_54, %c0_55] : memref<1x10xf32, #tpu.memory_space<vmem>>, vector<1x10xf32>
    %89 = vector.broadcast %88 : vector<1x10xf32> to vector<2x10xf32>
    %90 = arith.addf %87, %89 : vector<2x10xf32>
    %c0_56 = arith.constant 0 : index
    %c0_57 = arith.constant 0 : index
    %91 = vector.load %arg19[%c0_56, %c0_57] : memref<2x10xf32, #tpu.memory_space<vmem>>, vector<2x10xf32>
    tpu.vector_store %arg19[%c0_56, %c0_57], %90 {strides = array<i32>} : memref<2x10xf32, #tpu.memory_space<vmem>>, vector<2x10xf32>,
    return
  }
  func.func @transform_0(%arg0: i32) -> (i32, i32) {
    %c0_i32 = arith.constant 0 : i32
    %c0_i32_0 = arith.constant 0 : i32
    return %arg0, %c0_i32 : i32, i32
  }
  func.func @transform_1(%arg0: i32) -> (i32, i32) {
    %c0_i32 = arith.constant 0 : i32
    %c0_i32_0 = arith.constant 0 : i32
    %c0_i32_1 = arith.constant 0 : i32
    return %c0_i32, %c0_i32_0 : i32, i32
  }
  func.func @transform_2(%arg0: i32) -> (i32, i32) {
    %c0_i32 = arith.constant 0 : i32
    %c0_i32_0 = arith.constant 0 : i32
    %c0_i32_1 = arith.constant 0 : i32
    return %c0_i32, %c0_i32_0 : i32, i32
  }
  func.func @transform_3(%arg0: i32) -> (i32, i32) {
    %c0_i32 = arith.constant 0 : i32
    %c0_i32_0 = arith.constant 0 : i32
    %c0_i32_1 = arith.constant 0 : i32
    return %c0_i32, %c0_i32_0 : i32, i32
  }
  func.func @transform_4(%arg0: i32) -> (i32, i32) {
    %c0_i32 = arith.constant 0 : i32
    %c0_i32_0 = arith.constant 0 : i32
    %c0_i32_1 = arith.constant 0 : i32
    return %c0_i32, %c0_i32_0 : i32, i32
  }
  func.func @transform_5(%arg0: i32) -> (i32, i32) {
    %c0_i32 = arith.constant 0 : i32
    %c0_i32_0 = arith.constant 0 : i32
    %c0_i32_1 = arith.constant 0 : i32
    return %c0_i32, %c0_i32_0 : i32, i32
  }
  func.func @transform_6(%arg0: i32) -> (i32, i32) {
    %c0_i32 = arith.constant 0 : i32
    %c0_i32_0 = arith.constant 0 : i32
    %c0_i32_1 = arith.constant 0 : i32
    return %c0_i32, %c0_i32_0 : i32, i32
  }
  func.func @transform_7(%arg0: i32) -> (i32, i32) {
    %c0_i32 = arith.constant 0 : i32
    %c0_i32_0 = arith.constant 0 : i32
    %c0_i32_1 = arith.constant 0 : i32
    return %c0_i32, %c0_i32_0 : i32, i32
  }
  func.func @transform_8(%arg0: i32) -> (i32, i32) {
    %c0_i32 = arith.constant 0 : i32
    %c0_i32_0 = arith.constant 0 : i32
    %c0_i32_1 = arith.constant 0 : i32
    return %c0_i32, %c0_i32_0 : i32, i32
  }
  func.func @transform_9(%arg0: i32) -> (i32, i32) {
    %c0_i32 = arith.constant 0 : i32
    %c0_i32_0 = arith.constant 0 : i32
    %c0_i32_1 = arith.constant 0 : i32
    return %c0_i32, %c0_i32_0 : i32, i32
  }
  func.func @transform_10(%arg0: i32) -> (i32, i32) {
    %c0_i32 = arith.constant 0 : i32
    %c0_i32_0 = arith.constant 0 : i32
    %c0_i32_1 = arith.constant 0 : i32
    return %c0_i32, %c0_i32_0 : i32, i32
  }
  func.func @transform_11(%arg0: i32) -> (i32, i32) {
    %c0_i32 = arith.constant 0 : i32
    %c0_i32_0 = arith.constant 0 : i32
    %c0_i32_1 = arith.constant 0 : i32
    return %c0_i32, %c0_i32_0 : i32, i32
  }
  func.func @transform_12(%arg0: i32) -> (i32, i32) {
    %c0_i32 = arith.constant 0 : i32
    %c0_i32_0 = arith.constant 0 : i32
    %c0_i32_1 = arith.constant 0 : i32
    return %c0_i32, %c0_i32_0 : i32, i32
  }
  func.func @transform_13(%arg0: i32) -> (i32, i32, i32) {
    %c0_i32 = arith.constant 0 : i32
    %c0_i32_0 = arith.constant 0 : i32
    %c0_i32_1 = arith.constant 0 : i32
    %c0_i32_2 = arith.constant 0 : i32
    return %c0_i32, %c0_i32_0, %c0_i32_1 : i32, i32, i32
  }
  func.func @transform_14(%arg0: i32) -> (i32, i32, i32) {
    %c0_i32 = arith.constant 0 : i32
    %c0_i32_0 = arith.constant 0 : i32
    %c0_i32_1 = arith.constant 0 : i32
    %c0_i32_2 = arith.constant 0 : i32
    return %c0_i32, %c0_i32_0, %c0_i32_1 : i32, i32, i32
  }
  func.func @transform_15(%arg0: i32) -> (i32, i32) {
    %c0_i32 = arith.constant 0 : i32
    %c0_i32_0 = arith.constant 0 : i32
    %c0_i32_1 = arith.constant 0 : i32
    return %c0_i32, %c0_i32_0 : i32, i32
  }
  func.func @transform_16(%arg0: i32) -> (i32, i32) {
    %c0_i32 = arith.constant 0 : i32
    %c0_i32_0 = arith.constant 0 : i32
    %c0_i32_1 = arith.constant 0 : i32
    return %c0_i32, %c0_i32_0 : i32, i32
  }
  func.func @transform_17(%arg0: i32) -> (i32, i32) {
    %c0_i32 = arith.constant 0 : i32
    %c0_i32_0 = arith.constant 0 : i32
    %c0_i32_1 = arith.constant 0 : i32
    return %c0_i32, %c0_i32_0 : i32, i32
  }
  func.func @transform_18(%arg0: i32) -> (i32, i32) {
    %c0_i32 = arith.constant 0 : i32
    %c0_i32_0 = arith.constant 0 : i32
    return %arg0, %c0_i32 : i32, i32
  }
}

</mosaic_0001>

<llo_original>
// kernel: simple_cnn_forward.1
$region0: #{simple_cnn_forward.1}
  #allocation0 [shape = 'u32[]', space=smem, size = 0x4, offset = 0x4, fixed_abs, tag = 'smem constant byte address 0x4 - core index']
  #allocation1 [shape = 'u32[144,128]{1,0:T(1,128)}', space=vmem, size = 0x12000, scoped, tag = 'internal scratch']
  %s0 = inlined_call_operand.vmem [shape: f32[32,128], index: 0, kind: input, shape index: {}]
  %s1 = inlined_call_operand.vmem [shape: f32[32,1], index: 1, kind: input, shape index: {}]
  %s2 = inlined_call_operand.vmem [shape: f32[32,1], index: 2, kind: input, shape index: {}]
  %s3 = inlined_call_operand.vmem [shape: bf16[384,128], index: 3, kind: input, shape index: {}]
  %s4 = inlined_call_operand.vmem [shape: f32[1,128], index: 4, kind: input, shape index: {}]
  %s5 = inlined_call_operand.vmem [shape: f32[32,1], index: 5, kind: input, shape index: {}]
  %s6 = inlined_call_operand.vmem [shape: f32[32,1], index: 6, kind: input, shape index: {}]
  %s7 = inlined_call_operand.vmem [shape: bf16[384,128], index: 7, kind: input, shape index: {}]
  %s8 = inlined_call_operand.vmem [shape: f32[1,128], index: 8, kind: input, shape index: {}]
  %s9 = inlined_call_operand.vmem [shape: f32[32,1], index: 9, kind: input, shape index: {}]
  %s10 = inlined_call_operand.vmem [shape: f32[32,1], index: 10, kind: input, shape index: {}]
  %s11 = inlined_call_operand.vmem [shape: bf16[384,128], index: 11, kind: input, shape index: {}]
  %s12 = inlined_call_operand.vmem [shape: f32[1,128], index: 12, kind: input, shape index: {}]
  %s13 = inlined_call_operand.vmem [shape: bf16[2,2,32], index: 13, kind: input, shape index: {}]
  %s14 = inlined_call_operand.vmem [shape: bf16[2,128,128], index: 14, kind: input, shape index: {}]
  %s15 = inlined_call_operand.vmem [shape: f32[1,128], index: 15, kind: input, shape index: {}]
  %s16 = inlined_call_operand.vmem [shape: bf16[128,10], index: 16, kind: input, shape index: {}]
  %s17 = inlined_call_operand.vmem [shape: f32[1,10], index: 17, kind: input, shape index: {}]
  %s18 = inlined_call_operand.hbm [shape: f32[2,10], index: 18, kind: output, shape index: {}]
  %s19 = sld [smem:[#allocation0]]
  $region82: #{simple_cnn_forward.1} parent=0
    _
  %s21 = ssub.s32 1, %s19
  %s22 = scalar_select 0, %s21, %s19
  $region1: #{simple_cnn_forward.1} parent=0
    #allocation2 [shape = 'u8[1024]{0}', space=vmem, size = 0x400, scoped, tag = 'output window, operand 0, single buffered']
    #allocation3 [shape = 's32[1]{0}', space=sflag, size = 0x4, scoped, tag = 'scoped memory for simple_cnn_forward.1']
    %23 = vsyncpa [#allocation3], 0
    // Predicated region
    $region2: #{simple_cnn_forward.1} parent=1 // pred_check
      _
    $region3: #{simple_cnn_forward.1} parent=1 // pred_check_branch
      %25 = sbr.rel (0) target = $region5
    $region4: #{simple_cnn_forward.1} parent=1 // pred_region
      _
    $region5: #{simple_cnn_forward.1} parent=1 // pred_fallthru
      _
    // Predicated region
    $region6: #{simple_cnn_forward.1} parent=1 // pred_check
      _
    $region7: #{simple_cnn_forward.1} parent=1 // pred_check_branch
      %27 = sbr.rel (0) target = $region9
    $region8: #{simple_cnn_forward.1} parent=1 // pred_region
      _
    $region9: #{simple_cnn_forward.1} parent=1 // pred_fallthru
      _
    // Predicated region
    $region10: #{simple_cnn_forward.1} parent=1 // pred_check
      _
    $region11: #{simple_cnn_forward.1} parent=1 // pred_check_branch
      %29 = sbr.rel (0) target = $region13
    $region12: #{simple_cnn_forward.1} parent=1 // pred_region
      _
    $region13: #{simple_cnn_forward.1} parent=1 // pred_fallthru
      _
    // Predicated region
    $region14: #{simple_cnn_forward.1} parent=1 // pred_check
      _
    $region15: #{simple_cnn_forward.1} parent=1 // pred_check_branch
      %31 = sbr.rel (0) target = $region17
    $region16: #{simple_cnn_forward.1} parent=1 // pred_region
      _
    $region17: #{simple_cnn_forward.1} parent=1 // pred_fallthru
      _
    // Predicated region
    $region18: #{simple_cnn_forward.1} parent=1 // pred_check
      _
    $region19: #{simple_cnn_forward.1} parent=1 // pred_check_branch
      %33 = sbr.rel (0) target = $region21
    $region20: #{simple_cnn_forward.1} parent=1 // pred_region
      _
    $region21: #{simple_cnn_forward.1} parent=1 // pred_fallthru
      _
    // Predicated region
    $region22: #{simple_cnn_forward.1} parent=1 // pred_check
      _
    $region23: #{simple_cnn_forward.1} parent=1 // pred_check_branch
      %35 = sbr.rel (0) target = $region25
    $region24: #{simple_cnn_forward.1} parent=1 // pred_region
      _
    $region25: #{simple_cnn_forward.1} parent=1 // pred_fallthru
      _
    // Predicated region
    $region26: #{simple_cnn_forward.1} parent=1 // pred_check
      _
    $region27: #{simple_cnn_forward.1} parent=1 // pred_check_branch
      %37 = sbr.rel (0) target = $region29
    $region28: #{simple_cnn_forward.1} parent=1 // pred_region
      _
    $region29: #{simple_cnn_forward.1} parent=1 // pred_fallthru
      _
    // Predicated region
    $region30: #{simple_cnn_forward.1} parent=1 // pred_check
      _
    $region31: #{simple_cnn_forward.1} parent=1 // pred_check_branch
      %39 = sbr.rel (0) target = $region33
    $region32: #{simple_cnn_forward.1} parent=1 // pred_region
      _
    $region33: #{simple_cnn_forward.1} parent=1 // pred_fallthru
      _
    // Predicated region
    $region34: #{simple_cnn_forward.1} parent=1 // pred_check
      _
    $region35: #{simple_cnn_forward.1} parent=1 // pred_check_branch
      %41 = sbr.rel (0) target = $region37
    $region36: #{simple_cnn_forward.1} parent=1 // pred_region
      _
    $region37: #{simple_cnn_forward.1} parent=1 // pred_fallthru
      _
    // Predicated region
    $region38: #{simple_cnn_forward.1} parent=1 // pred_check
      _
    $region39: #{simple_cnn_forward.1} parent=1 // pred_check_branch
      %43 = sbr.rel (0) target = $region41
    $region40: #{simple_cnn_forward.1} parent=1 // pred_region
      _
    $region41: #{simple_cnn_forward.1} parent=1 // pred_fallthru
      _
    // Predicated region
    $region42: #{simple_cnn_forward.1} parent=1 // pred_check
      _
    $region43: #{simple_cnn_forward.1} parent=1 // pred_check_branch
      %45 = sbr.rel (0) target = $region45
    $region44: #{simple_cnn_forward.1} parent=1 // pred_region
      _
    $region45: #{simple_cnn_forward.1} parent=1 // pred_fallthru
      _
    // Predicated region
    $region46: #{simple_cnn_forward.1} parent=1 // pred_check
      _
    $region47: #{simple_cnn_forward.1} parent=1 // pred_check_branch
      %47 = sbr.rel (0) target = $region49
    $region48: #{simple_cnn_forward.1} parent=1 // pred_region
      _
    $region49: #{simple_cnn_forward.1} parent=1 // pred_fallthru
      _
    // Predicated region
    $region50: #{simple_cnn_forward.1} parent=1 // pred_check
      _
    $region51: #{simple_cnn_forward.1} parent=1 // pred_check_branch
      %49 = sbr.rel (0) target = $region53
    $region52: #{simple_cnn_forward.1} parent=1 // pred_region
      _
    $region53: #{simple_cnn_forward.1} parent=1 // pred_fallthru
      _
    // Predicated region
    $region54: #{simple_cnn_forward.1} parent=1 // pred_check
      _
    $region55: #{simple_cnn_forward.1} parent=1 // pred_check_branch
      %51 = sbr.rel (0) target = $region57
    $region56: #{simple_cnn_forward.1} parent=1 // pred_region
      _
    $region57: #{simple_cnn_forward.1} parent=1 // pred_fallthru
      _
    // Predicated region
    $region58: #{simple_cnn_forward.1} parent=1 // pred_check
      _
    $region59: #{simple_cnn_forward.1} parent=1 // pred_check_branch
      %53 = sbr.rel (0) target = $region61
    $region60: #{simple_cnn_forward.1} parent=1 // pred_region
      _
    $region61: #{simple_cnn_forward.1} parent=1 // pred_fallthru
      _
    // Predicated region
    $region62: #{simple_cnn_forward.1} parent=1 // pred_check
      _
    $region63: #{simple_cnn_forward.1} parent=1 // pred_check_branch
      %55 = sbr.rel (0) target = $region65
    $region64: #{simple_cnn_forward.1} parent=1 // pred_region
      _
    $region65: #{simple_cnn_forward.1} parent=1 // pred_fallthru
      _
    // Predicated region
    $region66: #{simple_cnn_forward.1} parent=1 // pred_check
      _
    $region67: #{simple_cnn_forward.1} parent=1 // pred_check_branch
      %57 = sbr.rel (0) target = $region69
    $region68: #{simple_cnn_forward.1} parent=1 // pred_region
      _
    $region69: #{simple_cnn_forward.1} parent=1 // pred_fallthru
      _
    // Predicated region
    $region70: #{simple_cnn_forward.1} parent=1 // pred_check
      _
    $region71: #{simple_cnn_forward.1} parent=1 // pred_check_branch
      %59 = sbr.rel (0) target = $region73
    $region72: #{simple_cnn_forward.1} parent=1 // pred_region
      _
    $region73: #{simple_cnn_forward.1} parent=1 // pred_fallthru
      _
    %v61 = vld [vmem:[%s0] sm:$0xff]
    %v62 = vld [vmem:[%s0 + $0x8] sm:$0xff]
    %v63 = vld [vmem:[%s0 + $0x10] sm:$0xff]
    %v64 = vld [vmem:[%s0 + $0x18] sm:$0xff]
    %v65 = vrot.slane %v61, 7
    %v66 = vrot.slane %v62, 7
    %v67 = vrot.slane %v63, 7
    %v68 = vrot.slane %v64, 7
    %v69 = vlaneseq
    %v70 = vshrl.u32 %v69, 7
    %vm71 = vcmp.lt.s32.totalorder %v70, 1
    %v72 = vsel %vm71, %v67, %v68
    %v73 = vsel %vm71, %v66, %v67
    %v74 = vsel %vm71, %v65, %v66
    %v75 = vsel %vm71, %v68, %v65
    %v76 = vld [vmem:[%s1] sm:$0xff]
    %v77 = vld [vmem:[%s1 + $0x8] sm:$0xff]
    %v78 = vld [vmem:[%s1 + $0x10] sm:$0xff]
    %v79 = vld [vmem:[%s1 + $0x18] sm:$0xff]
    %81 = vset.pattern.permute.xlu0 0
    %82 = vperm.xlu0 %81, %v76
    %v83 = vpop.permute.xlu0 %82
    %86 = vset.pattern.permute.xlu0 0
    %87 = vperm.xlu0 %86, %v77
    %v88 = vpop.permute.xlu0 %87
    %91 = vset.pattern.permute.xlu0 0
    %92 = vperm.xlu0 %91, %v78
    %v93 = vpop.permute.xlu0 %92
    %96 = vset.pattern.permute.xlu0 0
    %97 = vperm.xlu0 %96, %v79
    %v98 = vpop.permute.xlu0 %97
    %v100 = vmul.f32 %v75, %v83
    %v101 = vmul.f32 %v74, %v88
    %v102 = vmul.f32 %v73, %v93
    %v103 = vmul.f32 %v72, %v98
    %v104 = vrot.slane %v61, 1
    %v105 = vrot.slane %v62, 1
    %v106 = vrot.slane %v63, 1
    %v107 = vrot.slane %v64, 1
    %vm108 = vcmp.lt.s32.totalorder %v70, 7
    %v109 = vsel %vm108, %v106, %v107
    %v110 = vsel %vm108, %v105, %v106
    %v111 = vsel %vm108, %v104, %v105
    %v112 = vsel %vm108, %v107, %v104
    %v113 = vld [vmem:[%s2] sm:$0xff]
    %v114 = vld [vmem:[%s2 + $0x8] sm:$0xff]
    %v115 = vld [vmem:[%s2 + $0x10] sm:$0xff]
    %v116 = vld [vmem:[%s2 + $0x18] sm:$0xff]
    %118 = vset.pattern.permute.xlu0 0
    %119 = vperm.xlu0 %118, %v113
    %v120 = vpop.permute.xlu0 %119
    %123 = vset.pattern.permute.xlu0 0
    %124 = vperm.xlu0 %123, %v114
    %v125 = vpop.permute.xlu0 %124
    %128 = vset.pattern.permute.xlu0 0
    %129 = vperm.xlu0 %128, %v115
    %v130 = vpop.permute.xlu0 %129
    %133 = vset.pattern.permute.xlu0 0
    %134 = vperm.xlu0 %133, %v116
    %v135 = vpop.permute.xlu0 %134
    %v137 = vmul.f32 %v111, %v120
    %v138 = vmul.f32 %v110, %v125
    %v139 = vmul.f32 %v109, %v130
    %v140 = vmul.f32 %v112, %v135
    %v141 = vpack.c.bf16 %v101, %v100
    %v142 = vpack.c.bf16 %v62, %v61
    %v143 = vpack.c.bf16 %v138, %v137
    %v144 = vpack.c.bf16 %v103, %v102
    %v145 = vpack.c.bf16 %v64, %v63
    %v146 = vpack.c.bf16 %v140, %v139
    %v147 = vld [vmem:[%s3] sm:$0xf]
    %v148 = vld [vmem:[%s3 + $0x4] sm:$0xf]
    %v149 = vld [vmem:[%s3 + $0x8] sm:$0xf]
    %v150 = vld [vmem:[%s3 + $0xc] sm:$0xf]
    %v151 = vld [vmem:[%s3 + $0x10] sm:$0xf]
    %v152 = vld [vmem:[%s3 + $0x14] sm:$0xf]
    %v153 = vld [vmem:[%s3 + $0x18] sm:$0xf]
    %v154 = vld [vmem:[%s3 + $0x1c] sm:$0xf]
    %v155 = vld [vmem:[%s3 + $0x20] sm:$0xf]
    %v156 = vld [vmem:[%s3 + $0x24] sm:$0xf]
    %v157 = vld [vmem:[%s3 + $0x28] sm:$0xf]
    %v158 = vld [vmem:[%s3 + $0x2c] sm:$0xf]
    %v159 = vld [vmem:[%s3 + $0x30] sm:$0xf]
    %v160 = vld [vmem:[%s3 + $0x34] sm:$0xf]
    %v161 = vld [vmem:[%s3 + $0x38] sm:$0xf]
    %v162 = vld [vmem:[%s3 + $0x3c] sm:$0xf]
    %v163 = vld [vmem:[%s3 + $0x40] sm:$0xf]
    %v164 = vld [vmem:[%s3 + $0x44] sm:$0xf]
    %v165 = vld [vmem:[%s3 + $0x48] sm:$0xf]
    %v166 = vld [vmem:[%s3 + $0x4c] sm:$0xf]
    %v167 = vld [vmem:[%s3 + $0x50] sm:$0xf]
    %v168 = vld [vmem:[%s3 + $0x54] sm:$0xf]
    %v169 = vld [vmem:[%s3 + $0x58] sm:$0xf]
    %v170 = vld [vmem:[%s3 + $0x5c] sm:$0xf]
    %v171 = vld [vmem:[%s3 + $0x60] sm:$0xf]
    %v172 = vld [vmem:[%s3 + $0x64] sm:$0xf]
    %v173 = vld [vmem:[%s3 + $0x68] sm:$0xf]
    %v174 = vld [vmem:[%s3 + $0x6c] sm:$0xf]
    %v175 = vld [vmem:[%s3 + $0x70] sm:$0xf]
    %v176 = vld [vmem:[%s3 + $0x74] sm:$0xf]
    %v177 = vld [vmem:[%s3 + $0x78] sm:$0xf]
    %v178 = vld [vmem:[%s3 + $0x7c] sm:$0xf]
    %v179 = vld [vmem:[%s3 + $0x80] sm:$0xf]
    %v180 = vld [vmem:[%s3 + $0x84] sm:$0xf]
    %v181 = vld [vmem:[%s3 + $0x88] sm:$0xf]
    %v182 = vld [vmem:[%s3 + $0x8c] sm:$0xf]
    %v183 = vld [vmem:[%s3 + $0x90] sm:$0xf]
    %v184 = vld [vmem:[%s3 + $0x94] sm:$0xf]
    %v185 = vld [vmem:[%s3 + $0x98] sm:$0xf]
    %v186 = vld [vmem:[%s3 + $0x9c] sm:$0xf]
    %v187 = vld [vmem:[%s3 + $0xa0] sm:$0xf]
    %v188 = vld [vmem:[%s3 + $0xa4] sm:$0xf]
    %v189 = vld [vmem:[%s3 + $0xa8] sm:$0xf]
    %v190 = vld [vmem:[%s3 + $0xac] sm:$0xf]
    %v191 = vld [vmem:[%s3 + $0xb0] sm:$0xf]
    %v192 = vld [vmem:[%s3 + $0xb4] sm:$0xf]
    %v193 = vld [vmem:[%s3 + $0xb8] sm:$0xf]
    %v194 = vld [vmem:[%s3 + $0xbc] sm:$0xf]
    %v195 = vld [vmem:[%s4] sm:$0x1]
    %v197 = vlaneseq
    %v198 = vshrl.u32 %v197, 7
    %v199 = vsub.s32 0, %v198
    %v200 = vrot.slane %v195, %v199
    %v250 = vunpack.c.l.b16 %v147
    %v251 = vunpack.c.l.b16 %v148
    %v252 = vunpack.c.l.b16 %v149
    %v253 = vunpack.c.l.b16 %v150
    %v254 = vunpack.c.l.b16 %v151
    %v255 = vunpack.c.l.b16 %v152
    %v256 = vunpack.c.l.b16 %v153
    %v257 = vunpack.c.l.b16 %v154
    %v258 = vunpack.c.l.b16 %v155
    %v259 = vunpack.c.l.b16 %v156
    %v260 = vunpack.c.l.b16 %v157
    %v261 = vunpack.c.l.b16 %v158
    %v262 = vunpack.c.l.b16 %v159
    %v263 = vunpack.c.l.b16 %v160
    %v264 = vunpack.c.l.b16 %v161
    %v265 = vunpack.c.l.b16 %v162
    %v266 = vunpack.c.l.b16 %v163
    %v267 = vunpack.c.l.b16 %v164
    %v268 = vunpack.c.l.b16 %v165
    %v269 = vunpack.c.l.b16 %v166
    %v270 = vunpack.c.l.b16 %v167
    %v271 = vunpack.c.l.b16 %v168
    %v272 = vunpack.c.l.b16 %v169
    %v273 = vunpack.c.l.b16 %v170
    %v274 = vunpack.c.l.b16 %v171
    %v275 = vunpack.c.l.b16 %v172
    %v276 = vunpack.c.l.b16 %v173
    %v277 = vunpack.c.l.b16 %v174
    %v278 = vunpack.c.l.b16 %v175
    %v279 = vunpack.c.l.b16 %v176
    %v280 = vunpack.c.l.b16 %v177
    %v281 = vunpack.c.l.b16 %v178
    %v282 = vunpack.c.l.b16 %v179
    %v283 = vunpack.c.l.b16 %v180
    %v284 = vunpack.c.l.b16 %v181
    %v285 = vunpack.c.l.b16 %v182
    %v286 = vunpack.c.l.b16 %v183
    %v287 = vunpack.c.l.b16 %v184
    %v288 = vunpack.c.l.b16 %v185
    %v289 = vunpack.c.l.b16 %v186
    %v290 = vunpack.c.l.b16 %v187
    %v291 = vunpack.c.l.b16 %v188
    %v292 = vunpack.c.l.b16 %v189
    %v293 = vunpack.c.l.b16 %v190
    %v294 = vunpack.c.l.b16 %v191
    %v295 = vunpack.c.l.b16 %v192
    %v296 = vunpack.c.l.b16 %v193
    %v297 = vunpack.c.l.b16 %v194
    %v298 = vpack.c.b16 %v251, %v250
    %v299 = vpack.c.b16 %v253, %v252
    %v300 = vpack.c.b16 %v255, %v254
    %v301 = vpack.c.b16 %v257, %v256
    %v302 = vpack.c.b16 %v259, %v258
    %v303 = vpack.c.b16 %v261, %v260
    %v304 = vpack.c.b16 %v263, %v262
    %v305 = vpack.c.b16 %v265, %v264
    %v306 = vpack.c.b16 %v267, %v266
    %v307 = vpack.c.b16 %v269, %v268
    %v308 = vpack.c.b16 %v271, %v270
    %v309 = vpack.c.b16 %v273, %v272
    %v310 = vpack.c.b16 %v275, %v274
    %v311 = vpack.c.b16 %v277, %v276
    %v312 = vpack.c.b16 %v279, %v278
    %v313 = vpack.c.b16 %v281, %v280
    %v314 = vpack.c.b16 %v283, %v282
    %v315 = vpack.c.b16 %v285, %v284
    %v316 = vpack.c.b16 %v287, %v286
    %v317 = vpack.c.b16 %v289, %v288
    %v318 = vpack.c.b16 %v291, %v290
    %v319 = vpack.c.b16 %v293, %v292
    %v320 = vpack.c.b16 %v295, %v294
    %v321 = vpack.c.b16 %v297, %v296
    %346 = vmatprep.subr.bf16.mxu0 0
    %347 = vmatpush1.bf16.msra.mxu0 %v298
    %348 = vmatprep.subr.bf16.mxu0 0
    %349 = vmatpush1.bf16.msra.mxu0 %v299
    %350 = vmatprep.subr.bf16.mxu0 0
    %351 = vmatpush1.bf16.msra.mxu0 %v300
    %352 = vmatprep.subr.bf16.mxu0 0
    %353 = vmatpush1.bf16.msra.mxu0 %v301
    %354 = vmatprep.subr.bf16.mxu0 0
    %355 = vmatpush1.bf16.msra.mxu0 %v302
    %356 = vmatprep.subr.bf16.mxu0 0
    %357 = vmatpush1.bf16.msra.mxu0 %v303
    %358 = vmatprep.subr.bf16.mxu0 0
    %359 = vmatpush1.bf16.msra.mxu0 %v304
    %360 = vmatprep.subr.bf16.mxu0 0
    %361 = vmatpush1.bf16.msra.mxu0 %v305
    %362 = vmatprep.subr.bf16.mxu0 0
    %363 = vmatpush1.bf16.msra.mxu0 %v306
    %364 = vmatprep.subr.bf16.mxu0 0
    %365 = vmatpush1.bf16.msra.mxu0 %v307
    %366 = vmatprep.subr.bf16.mxu0 0
    %367 = vmatpush1.bf16.msra.mxu0 %v308
    %368 = vmatprep.subr.bf16.mxu0 0
    %369 = vmatpush1.bf16.msra.mxu0 %v309
    %370 = vmatprep.subr.bf16.mxu0 0
    %371 = vmatpush1.bf16.msra.mxu0 %v310
    %372 = vmatprep.subr.bf16.mxu0 0
    %373 = vmatpush1.bf16.msra.mxu0 %v311
    %374 = vmatprep.subr.bf16.mxu0 0
    %375 = vmatpush1.bf16.msra.mxu0 %v312
    %376 = vmatprep.subr.bf16.mxu0 0
    %377 = vmatpush1.bf16.msra.mxu0 %v313
    %378 = vmatprep.mubr.bf16.mxu0 %v142
    %379 = vmatmul.mubr.bf16.gmra.mrb[0].mxu0 %v141
    %v380 = vpop.f32.mrb[0].mxu0
    %v381 = vadd.f32 %v200, %v380
    %v382 = vpop.f32.mrb[0].mxu0
    %v383 = vpop.f32.mrb[0].mxu0
    %v384 = vadd.f32 %v200, %v383
    %v385 = vpop.f32.mrb[0].mxu0
    %386 = vmatprep.mubr.bf16.mxu0 %v145
    %387 = vmatmul.mubr.bf16.gmra.mrb[0].mxu0 %v144
    %v388 = vpop.f32.mrb[0].mxu0
    %v389 = vadd.f32 %v200, %v388
    %v390 = vpop.f32.mrb[0].mxu0
    %v391 = vpop.f32.mrb[0].mxu0
    %v392 = vadd.f32 %v200, %v391
    %v393 = vpop.f32.mrb[0].mxu0
    %394 = vdwg.mxu0
    %395 = vmatprep.subr.bf16.mxu0 0
    %396 = vmatpush1.bf16.msra.mxu0 %v314
    %397 = vmatprep.subr.bf16.mxu0 0
    %398 = vmatpush1.bf16.msra.mxu0 %v315
    %399 = vmatprep.subr.bf16.mxu0 0
    %400 = vmatpush1.bf16.msra.mxu0 %v316
    %401 = vmatprep.subr.bf16.mxu0 0
    %402 = vmatpush1.bf16.msra.mxu0 %v317
    %403 = vmatprep.subr.bf16.mxu0 0
    %404 = vmatpush1.bf16.msra.mxu0 %v318
    %405 = vmatprep.subr.bf16.mxu0 0
    %406 = vmatpush1.bf16.msra.mxu0 %v319
    %407 = vmatprep.subr.bf16.mxu0 0
    %408 = vmatpush1.bf16.msra.mxu0 %v320
    %409 = vmatprep.subr.bf16.mxu0 0
    %410 = vmatpush1.bf16.msra.mxu0 %v321
    %411 = vmatprep.subr.bf16.mxu0 0
    %412 = vmatpush1.bf16.msra.mxu0 0
    %413 = vmatprep.subr.bf16.mxu0 0
    %414 = vmatpush1.bf16.msra.mxu0 0
    %415 = vmatprep.subr.bf16.mxu0 0
    %416 = vmatpush1.bf16.msra.mxu0 0
    %417 = vmatprep.subr.bf16.mxu0 0
    %418 = vmatpush1.bf16.msra.mxu0 0
    %419 = vmatprep.subr.bf16.mxu0 0
    %420 = vmatpush1.bf16.msra.mxu0 0
    %421 = vmatprep.subr.bf16.mxu0 0
    %422 = vmatpush1.bf16.msra.mxu0 0
    %423 = vmatprep.subr.bf16.mxu0 0
    %424 = vmatpush1.bf16.msra.mxu0 0
    %425 = vmatprep.subr.bf16.mxu0 0
    %426 = vmatpush1.bf16.msra.mxu0 0
    %427 = vmatprep.mubr.bf16.mxu0 0
    %428 = vmatmul.mubr.bf16.gmra.mrb[0].mxu0 %v143
    %v429 = vpop.f32.mrb[0].mxu0
    %v430 = vadd.f32 %v381, %v429
    %v431 = vpop.f32.mrb[0].mxu0
    %v432 = vpop.f32.mrb[0].mxu0
    %v433 = vadd.f32 %v384, %v432
    %v434 = vpop.f32.mrb[0].mxu0
    %435 = vmatprep.mubr.bf16.mxu0 0
    %436 = vmatmul.mubr.bf16.gmra.mrb[0].mxu0 %v146
    %v437 = vpop.f32.mrb[0].mxu0
    %v438 = vadd.f32 %v389, %v437
    %v439 = vpop.f32.mrb[0].mxu0
    %v440 = vpop.f32.mrb[0].mxu0
    %v441 = vadd.f32 %v392, %v440
    %v442 = vpop.f32.mrb[0].mxu0
    %443 = vdwg.mxu0
    %v444 = vmax.f32 %v430, 0.0
    %v445 = vmax.f32 %v433, 0.0
    %v446 = vmax.f32 %v438, 0.0
    %v447 = vmax.f32 %v441, 0.0
    %448 = vrot.lane.b32.xlu0 %v444, 120
    %v449 = vpop.permute.xlu0 %448
    %450 = vrot.lane.b32.xlu0 %v445, 120
    %v451 = vpop.permute.xlu0 %450
    %452 = vrot.lane.b32.xlu0 %v446, 120
    %v453 = vpop.permute.xlu0 %452
    %454 = vrot.lane.b32.xlu0 %v447, 120
    %v455 = vpop.permute.xlu0 %454
    %v456 = vmax.f32 %v444, %v449
    %v457 = vmax.f32 %v445, %v451
    %v458 = vmax.f32 %v446, %v453
    %v459 = vmax.f32 %v447, %v455
    %v460 = vrot.slane %v456, 1
    %v461 = vrot.slane %v457, 1
    %v462 = vrot.slane %v458, 1
    %v463 = vrot.slane %v459, 1
    %v464 = vsel %vm108, %v462, %v463
    %v465 = vsel %vm108, %v461, %v462
    %v466 = vsel %vm108, %v460, %v461
    %v467 = vsel %vm108, %v463, %v460
    %v468 = vmax.f32 %v456, %v466
    %v469 = vmax.f32 %v457, %v465
    %v470 = vmax.f32 %v458, %v464
    %v471 = vmax.f32 %v459, %v467
    %v472 = vrot.slane %v468, 6
    %v473 = vrot.slane %v469, 6
    %v474 = vrot.slane %v470, 6
    %v475 = vrot.slane %v471, 6
    %vm476 = vcmp.lt.s32.totalorder %v70, 2
    %v477 = vsel %vm476, %v474, %v475
    %v478 = vsel %vm476, %v473, %v474
    %v479 = vsel %vm476, %v472, %v473
    %v480 = vsel %vm476, %v475, %v472
    %v481 = vld [vmem:[%s5] sm:$0xff]
    %v482 = vld [vmem:[%s5 + $0x8] sm:$0xff]
    %v483 = vld [vmem:[%s5 + $0x10] sm:$0xff]
    %v484 = vld [vmem:[%s5 + $0x18] sm:$0xff]
    %486 = vset.pattern.permute.xlu0 0
    %487 = vperm.xlu0 %486, %v481
    %v488 = vpop.permute.xlu0 %487
    %491 = vset.pattern.permute.xlu0 0
    %492 = vperm.xlu0 %491, %v482
    %v493 = vpop.permute.xlu0 %492
    %496 = vset.pattern.permute.xlu0 0
    %497 = vperm.xlu0 %496, %v483
    %v498 = vpop.permute.xlu0 %497
    %501 = vset.pattern.permute.xlu0 0
    %502 = vperm.xlu0 %501, %v484
    %v503 = vpop.permute.xlu0 %502
    %v505 = vmul.f32 %v480, %v488
    %v506 = vmul.f32 %v479, %v493
    %v507 = vmul.f32 %v478, %v498
    %v508 = vmul.f32 %v477, %v503
    %v509 = vrot.slane %v468, 2
    %v510 = vrot.slane %v469, 2
    %v511 = vrot.slane %v470, 2
    %v512 = vrot.slane %v471, 2
    %vm513 = vcmp.lt.s32.totalorder %v70, 6
    %v514 = vsel %vm513, %v511, %v512
    %v515 = vsel %vm513, %v510, %v511
    %v516 = vsel %vm513, %v509, %v510
    %v517 = vsel %vm513, %v512, %v509
    %v518 = vld [vmem:[%s6] sm:$0xff]
    %v519 = vld [vmem:[%s6 + $0x8] sm:$0xff]
    %v520 = vld [vmem:[%s6 + $0x10] sm:$0xff]
    %v521 = vld [vmem:[%s6 + $0x18] sm:$0xff]
    %523 = vset.pattern.permute.xlu0 0
    %524 = vperm.xlu0 %523, %v518
    %v525 = vpop.permute.xlu0 %524
    %528 = vset.pattern.permute.xlu0 0
    %529 = vperm.xlu0 %528, %v519
    %v530 = vpop.permute.xlu0 %529
    %533 = vset.pattern.permute.xlu0 0
    %534 = vperm.xlu0 %533, %v520
    %v535 = vpop.permute.xlu0 %534
    %538 = vset.pattern.permute.xlu0 0
    %539 = vperm.xlu0 %538, %v521
    %v540 = vpop.permute.xlu0 %539
    %v542 = vmul.f32 %v516, %v525
    %v543 = vmul.f32 %v515, %v530
    %v544 = vmul.f32 %v514, %v535
    %v545 = vmul.f32 %v517, %v540
    %v546 = vpack.c.bf16 %v506, %v505
    %v547 = vpack.c.bf16 %v469, %v468
    %v548 = vpack.c.bf16 %v543, %v542
    %v549 = vpack.c.bf16 %v508, %v507
    %v550 = vpack.c.bf16 %v471, %v470
    %v551 = vpack.c.bf16 %v545, %v544
    %v552 = vld [vmem:[%s7] sm:$0xf]
    %v553 = vld [vmem:[%s7 + $0x4] sm:$0xf]
    %v554 = vld [vmem:[%s7 + $0x8] sm:$0xf]
    %v555 = vld [vmem:[%s7 + $0xc] sm:$0xf]
    %v556 = vld [vmem:[%s7 + $0x10] sm:$0xf]
    %v557 = vld [vmem:[%s7 + $0x14] sm:$0xf]
    %v558 = vld [vmem:[%s7 + $0x18] sm:$0xf]
    %v559 = vld [vmem:[%s7 + $0x1c] sm:$0xf]
    %v560 = vld [vmem:[%s7 + $0x20] sm:$0xf]
    %v561 = vld [vmem:[%s7 + $0x24] sm:$0xf]
    %v562 = vld [vmem:[%s7 + $0x28] sm:$0xf]
    %v563 = vld [vmem:[%s7 + $0x2c] sm:$0xf]
    %v564 = vld [vmem:[%s7 + $0x30] sm:$0xf]
    %v565 = vld [vmem:[%s7 + $0x34] sm:$0xf]
    %v566 = vld [vmem:[%s7 + $0x38] sm:$0xf]
    %v567 = vld [vmem:[%s7 + $0x3c] sm:$0xf]
    %v568 = vld [vmem:[%s7 + $0x40] sm:$0xf]
    %v569 = vld [vmem:[%s7 + $0x44] sm:$0xf]
    %v570 = vld [vmem:[%s7 + $0x48] sm:$0xf]
    %v571 = vld [vmem:[%s7 + $0x4c] sm:$0xf]
    %v572 = vld [vmem:[%s7 + $0x50] sm:$0xf]
    %v573 = vld [vmem:[%s7 + $0x54] sm:$0xf]
    %v574 = vld [vmem:[%s7 + $0x58] sm:$0xf]
    %v575 = vld [vmem:[%s7 + $0x5c] sm:$0xf]
    %v576 = vld [vmem:[%s7 + $0x60] sm:$0xf]
    %v577 = vld [vmem:[%s7 + $0x64] sm:$0xf]
    %v578 = vld [vmem:[%s7 + $0x68] sm:$0xf]
    %v579 = vld [vmem:[%s7 + $0x6c] sm:$0xf]
    %v580 = vld [vmem:[%s7 + $0x70] sm:$0xf]
    %v581 = vld [vmem:[%s7 + $0x74] sm:$0xf]
    %v582 = vld [vmem:[%s7 + $0x78] sm:$0xf]
    %v583 = vld [vmem:[%s7 + $0x7c] sm:$0xf]
    %v584 = vld [vmem:[%s7 + $0x80] sm:$0xf]
    %v585 = vld [vmem:[%s7 + $0x84] sm:$0xf]
    %v586 = vld [vmem:[%s7 + $0x88] sm:$0xf]
    %v587 = vld [vmem:[%s7 + $0x8c] sm:$0xf]
    %v588 = vld [vmem:[%s7 + $0x90] sm:$0xf]
    %v589 = vld [vmem:[%s7 + $0x94] sm:$0xf]
    %v590 = vld [vmem:[%s7 + $0x98] sm:$0xf]
    %v591 = vld [vmem:[%s7 + $0x9c] sm:$0xf]
    %v592 = vld [vmem:[%s7 + $0xa0] sm:$0xf]
    %v593 = vld [vmem:[%s7 + $0xa4] sm:$0xf]
    %v594 = vld [vmem:[%s7 + $0xa8] sm:$0xf]
    %v595 = vld [vmem:[%s7 + $0xac] sm:$0xf]
    %v596 = vld [vmem:[%s7 + $0xb0] sm:$0xf]
    %v597 = vld [vmem:[%s7 + $0xb4] sm:$0xf]
    %v598 = vld [vmem:[%s7 + $0xb8] sm:$0xf]
    %v599 = vld [vmem:[%s7 + $0xbc] sm:$0xf]
    %v600 = vld [vmem:[%s8] sm:$0x1]
    %v602 = vlaneseq
    %v603 = vshrl.u32 %v602, 7
    %v604 = vsub.s32 0, %v603
    %v605 = vrot.slane %v600, %v604
    %v655 = vunpack.c.l.b16 %v552
    %v656 = vunpack.c.l.b16 %v553
    %v657 = vunpack.c.l.b16 %v554
    %v658 = vunpack.c.l.b16 %v555
    %v659 = vunpack.c.l.b16 %v556
    %v660 = vunpack.c.l.b16 %v557
    %v661 = vunpack.c.l.b16 %v558
    %v662 = vunpack.c.l.b16 %v559
    %v663 = vunpack.c.l.b16 %v560
    %v664 = vunpack.c.l.b16 %v561
    %v665 = vunpack.c.l.b16 %v562
    %v666 = vunpack.c.l.b16 %v563
    %v667 = vunpack.c.l.b16 %v564
    %v668 = vunpack.c.l.b16 %v565
    %v669 = vunpack.c.l.b16 %v566
    %v670 = vunpack.c.l.b16 %v567
    %v671 = vunpack.c.l.b16 %v568
    %v672 = vunpack.c.l.b16 %v569
    %v673 = vunpack.c.l.b16 %v570
    %v674 = vunpack.c.l.b16 %v571
    %v675 = vunpack.c.l.b16 %v572
    %v676 = vunpack.c.l.b16 %v573
    %v677 = vunpack.c.l.b16 %v574
    %v678 = vunpack.c.l.b16 %v575
    %v679 = vunpack.c.l.b16 %v576
    %v680 = vunpack.c.l.b16 %v577
    %v681 = vunpack.c.l.b16 %v578
    %v682 = vunpack.c.l.b16 %v579
    %v683 = vunpack.c.l.b16 %v580
    %v684 = vunpack.c.l.b16 %v581
    %v685 = vunpack.c.l.b16 %v582
    %v686 = vunpack.c.l.b16 %v583
    %v687 = vunpack.c.l.b16 %v584
    %v688 = vunpack.c.l.b16 %v585
    %v689 = vunpack.c.l.b16 %v586
    %v690 = vunpack.c.l.b16 %v587
    %v691 = vunpack.c.l.b16 %v588
    %v692 = vunpack.c.l.b16 %v589
    %v693 = vunpack.c.l.b16 %v590
    %v694 = vunpack.c.l.b16 %v591
    %v695 = vunpack.c.l.b16 %v592
    %v696 = vunpack.c.l.b16 %v593
    %v697 = vunpack.c.l.b16 %v594
    %v698 = vunpack.c.l.b16 %v595
    %v699 = vunpack.c.l.b16 %v596
    %v700 = vunpack.c.l.b16 %v597
    %v701 = vunpack.c.l.b16 %v598
    %v702 = vunpack.c.l.b16 %v599
    %v703 = vpack.c.b16 %v656, %v655
    %v704 = vpack.c.b16 %v658, %v657
    %v705 = vpack.c.b16 %v660, %v659
    %v706 = vpack.c.b16 %v662, %v661
    %v707 = vpack.c.b16 %v664, %v663
    %v708 = vpack.c.b16 %v666, %v665
    %v709 = vpack.c.b16 %v668, %v667
    %v710 = vpack.c.b16 %v670, %v669
    %v711 = vpack.c.b16 %v672, %v671
    %v712 = vpack.c.b16 %v674, %v673
    %v713 = vpack.c.b16 %v676, %v675
    %v714 = vpack.c.b16 %v678, %v677
    %v715 = vpack.c.b16 %v680, %v679
    %v716 = vpack.c.b16 %v682, %v681
    %v717 = vpack.c.b16 %v684, %v683
    %v718 = vpack.c.b16 %v686, %v685
    %v719 = vpack.c.b16 %v688, %v687
    %v720 = vpack.c.b16 %v690, %v689
    %v721 = vpack.c.b16 %v692, %v691
    %v722 = vpack.c.b16 %v694, %v693
    %v723 = vpack.c.b16 %v696, %v695
    %v724 = vpack.c.b16 %v698, %v697
    %v725 = vpack.c.b16 %v700, %v699
    %v726 = vpack.c.b16 %v702, %v701
    %751 = vmatprep.subr.bf16.mxu0 0
    %752 = vmatpush1.bf16.msra.mxu0 %v703
    %753 = vmatprep.subr.bf16.mxu0 0
    %754 = vmatpush1.bf16.msra.mxu0 %v704
    %755 = vmatprep.subr.bf16.mxu0 0
    %756 = vmatpush1.bf16.msra.mxu0 %v705
    %757 = vmatprep.subr.bf16.mxu0 0
    %758 = vmatpush1.bf16.msra.mxu0 %v706
    %759 = vmatprep.subr.bf16.mxu0 0
    %760 = vmatpush1.bf16.msra.mxu0 %v707
    %761 = vmatprep.subr.bf16.mxu0 0
    %762 = vmatpush1.bf16.msra.mxu0 %v708
    %763 = vmatprep.subr.bf16.mxu0 0
    %764 = vmatpush1.bf16.msra.mxu0 %v709
    %765 = vmatprep.subr.bf16.mxu0 0
    %766 = vmatpush1.bf16.msra.mxu0 %v710
    %767 = vmatprep.subr.bf16.mxu0 0
    %768 = vmatpush1.bf16.msra.mxu0 %v711
    %769 = vmatprep.subr.bf16.mxu0 0
    %770 = vmatpush1.bf16.msra.mxu0 %v712
    %771 = vmatprep.subr.bf16.mxu0 0
    %772 = vmatpush1.bf16.msra.mxu0 %v713
    %773 = vmatprep.subr.bf16.mxu0 0
    %774 = vmatpush1.bf16.msra.mxu0 %v714
    %775 = vmatprep.subr.bf16.mxu0 0
    %776 = vmatpush1.bf16.msra.mxu0 %v715
    %777 = vmatprep.subr.bf16.mxu0 0
    %778 = vmatpush1.bf16.msra.mxu0 %v716
    %779 = vmatprep.subr.bf16.mxu0 0
    %780 = vmatpush1.bf16.msra.mxu0 %v717
    %781 = vmatprep.subr.bf16.mxu0 0
    %782 = vmatpush1.bf16.msra.mxu0 %v718
    %783 = vmatprep.mubr.bf16.mxu0 %v547
    %784 = vmatmul.mubr.bf16.gmra.mrb[0].mxu0 %v546
    %v785 = vpop.f32.mrb[0].mxu0
    %v786 = vadd.f32 %v605, %v785
    %v787 = vpop.f32.mrb[0].mxu0
    %v788 = vpop.f32.mrb[0].mxu0
    %v789 = vadd.f32 %v605, %v788
    %v790 = vpop.f32.mrb[0].mxu0
    %791 = vmatprep.mubr.bf16.mxu0 %v550
    %792 = vmatmul.mubr.bf16.gmra.mrb[0].mxu0 %v549
    %v793 = vpop.f32.mrb[0].mxu0
    %v794 = vadd.f32 %v605, %v793
    %v795 = vpop.f32.mrb[0].mxu0
    %v796 = vpop.f32.mrb[0].mxu0
    %v797 = vadd.f32 %v605, %v796
    %v798 = vpop.f32.mrb[0].mxu0
    %799 = vdwg.mxu0
    %800 = vmatprep.subr.bf16.mxu0 0
    %801 = vmatpush1.bf16.msra.mxu0 %v719
    %802 = vmatprep.subr.bf16.mxu0 0
    %803 = vmatpush1.bf16.msra.mxu0 %v720
    %804 = vmatprep.subr.bf16.mxu0 0
    %805 = vmatpush1.bf16.msra.mxu0 %v721
    %806 = vmatprep.subr.bf16.mxu0 0
    %807 = vmatpush1.bf16.msra.mxu0 %v722
    %808 = vmatprep.subr.bf16.mxu0 0
    %809 = vmatpush1.bf16.msra.mxu0 %v723
    %810 = vmatprep.subr.bf16.mxu0 0
    %811 = vmatpush1.bf16.msra.mxu0 %v724
    %812 = vmatprep.subr.bf16.mxu0 0
    %813 = vmatpush1.bf16.msra.mxu0 %v725
    %814 = vmatprep.subr.bf16.mxu0 0
    %815 = vmatpush1.bf16.msra.mxu0 %v726
    %816 = vmatprep.subr.bf16.mxu0 0
    %817 = vmatpush1.bf16.msra.mxu0 0
    %818 = vmatprep.subr.bf16.mxu0 0
    %819 = vmatpush1.bf16.msra.mxu0 0
    %820 = vmatprep.subr.bf16.mxu0 0
    %821 = vmatpush1.bf16.msra.mxu0 0
    %822 = vmatprep.subr.bf16.mxu0 0
    %823 = vmatpush1.bf16.msra.mxu0 0
    %824 = vmatprep.subr.bf16.mxu0 0
    %825 = vmatpush1.bf16.msra.mxu0 0
    %826 = vmatprep.subr.bf16.mxu0 0
    %827 = vmatpush1.bf16.msra.mxu0 0
    %828 = vmatprep.subr.bf16.mxu0 0
    %829 = vmatpush1.bf16.msra.mxu0 0
    %830 = vmatprep.subr.bf16.mxu0 0
    %831 = vmatpush1.bf16.msra.mxu0 0
    %832 = vmatprep.mubr.bf16.mxu0 0
    %833 = vmatmul.mubr.bf16.gmra.mrb[0].mxu0 %v548
    %v834 = vpop.f32.mrb[0].mxu0
    %v835 = vadd.f32 %v786, %v834
    %v836 = vpop.f32.mrb[0].mxu0
    %v837 = vpop.f32.mrb[0].mxu0
    %v838 = vadd.f32 %v789, %v837
    %v839 = vpop.f32.mrb[0].mxu0
    %840 = vmatprep.mubr.bf16.mxu0 0
    %841 = vmatmul.mubr.bf16.gmra.mrb[0].mxu0 %v551
    %v842 = vpop.f32.mrb[0].mxu0
    %v843 = vadd.f32 %v794, %v842
    %v844 = vpop.f32.mrb[0].mxu0
    %v845 = vpop.f32.mrb[0].mxu0
    %v846 = vadd.f32 %v797, %v845
    %v847 = vpop.f32.mrb[0].mxu0
    %848 = vdwg.mxu0
    %v849 = vmax.f32 %v835, 0.0
    %v850 = vmax.f32 %v838, 0.0
    %v851 = vmax.f32 %v843, 0.0
    %v852 = vmax.f32 %v846, 0.0
    %853 = vrot.lane.b32.xlu0 %v849, 112
    %v854 = vpop.permute.xlu0 %853
    %855 = vrot.lane.b32.xlu0 %v850, 112
    %v856 = vpop.permute.xlu0 %855
    %857 = vrot.lane.b32.xlu0 %v851, 112
    %v858 = vpop.permute.xlu0 %857
    %859 = vrot.lane.b32.xlu0 %v852, 112
    %v860 = vpop.permute.xlu0 %859
    %v861 = vmax.f32 %v849, %v854
    %v862 = vmax.f32 %v850, %v856
    %v863 = vmax.f32 %v851, %v858
    %v864 = vmax.f32 %v852, %v860
    %v865 = vrot.slane %v861, 2
    %v866 = vrot.slane %v862, 2
    %v867 = vrot.slane %v863, 2
    %v868 = vrot.slane %v864, 2
    %v869 = vsel %vm513, %v867, %v868
    %v870 = vsel %vm513, %v866, %v867
    %v871 = vsel %vm513, %v865, %v866
    %v872 = vsel %vm513, %v868, %v865
    %v873 = vmax.f32 %v861, %v871
    %v874 = vmax.f32 %v862, %v870
    %v875 = vmax.f32 %v863, %v869
    %v876 = vmax.f32 %v864, %v872
    %v877 = vrot.slane %v873, 4
    %v878 = vrot.slane %v874, 4
    %v879 = vrot.slane %v875, 4
    %v880 = vrot.slane %v876, 4
    %vm881 = vcmp.lt.s32.totalorder %v70, 4
    %v882 = vsel %vm881, %v879, %v880
    %v883 = vsel %vm881, %v878, %v879
    %v884 = vsel %vm881, %v877, %v878
    %v885 = vsel %vm881, %v880, %v877
    %v886 = vld [vmem:[%s9] sm:$0xff]
    %v887 = vld [vmem:[%s9 + $0x8] sm:$0xff]
    %v888 = vld [vmem:[%s9 + $0x10] sm:$0xff]
    %v889 = vld [vmem:[%s9 + $0x18] sm:$0xff]
    %891 = vset.pattern.permute.xlu0 0
    %892 = vperm.xlu0 %891, %v886
    %v893 = vpop.permute.xlu0 %892
    %896 = vset.pattern.permute.xlu0 0
    %897 = vperm.xlu0 %896, %v887
    %v898 = vpop.permute.xlu0 %897
    %901 = vset.pattern.permute.xlu0 0
    %902 = vperm.xlu0 %901, %v888
    %v903 = vpop.permute.xlu0 %902
    %906 = vset.pattern.permute.xlu0 0
    %907 = vperm.xlu0 %906, %v889
    %v908 = vpop.permute.xlu0 %907
    %v910 = vmul.f32 %v885, %v893
    %v911 = vmul.f32 %v884, %v898
    %v912 = vmul.f32 %v883, %v903
    %v913 = vmul.f32 %v882, %v908
    %v914 = vld [vmem:[%s10] sm:$0xff]
    %v915 = vld [vmem:[%s10 + $0x8] sm:$0xff]
    %v916 = vld [vmem:[%s10 + $0x10] sm:$0xff]
    %v917 = vld [vmem:[%s10 + $0x18] sm:$0xff]
    %919 = vset.pattern.permute.xlu0 0
    %920 = vperm.xlu0 %919, %v914
    %v921 = vpop.permute.xlu0 %920
    %924 = vset.pattern.permute.xlu0 0
    %925 = vperm.xlu0 %924, %v915
    %v926 = vpop.permute.xlu0 %925
    %929 = vset.pattern.permute.xlu0 0
    %930 = vperm.xlu0 %929, %v916
    %v931 = vpop.permute.xlu0 %930
    %934 = vset.pattern.permute.xlu0 0
    %935 = vperm.xlu0 %934, %v917
    %v936 = vpop.permute.xlu0 %935
    %v938 = vmul.f32 %v884, %v921
    %v939 = vmul.f32 %v883, %v926
    %v940 = vmul.f32 %v882, %v931
    %v941 = vmul.f32 %v885, %v936
    %v942 = vpack.c.bf16 %v911, %v910
    %v943 = vpack.c.bf16 %v874, %v873
    %v944 = vpack.c.bf16 %v939, %v938
    %v945 = vpack.c.bf16 %v913, %v912
    %v946 = vpack.c.bf16 %v876, %v875
    %v947 = vpack.c.bf16 %v941, %v940
    %v948 = vld [vmem:[%s11] sm:$0xf]
    %v949 = vld [vmem:[%s11 + $0x4] sm:$0xf]
    %v950 = vld [vmem:[%s11 + $0x8] sm:$0xf]
    %v951 = vld [vmem:[%s11 + $0xc] sm:$0xf]
    %v952 = vld [vmem:[%s11 + $0x10] sm:$0xf]
    %v953 = vld [vmem:[%s11 + $0x14] sm:$0xf]
    %v954 = vld [vmem:[%s11 + $0x18] sm:$0xf]
    %v955 = vld [vmem:[%s11 + $0x1c] sm:$0xf]
    %v956 = vld [vmem:[%s11 + $0x20] sm:$0xf]
    %v957 = vld [vmem:[%s11 + $0x24] sm:$0xf]
    %v958 = vld [vmem:[%s11 + $0x28] sm:$0xf]
    %v959 = vld [vmem:[%s11 + $0x2c] sm:$0xf]
    %v960 = vld [vmem:[%s11 + $0x30] sm:$0xf]
    %v961 = vld [vmem:[%s11 + $0x34] sm:$0xf]
    %v962 = vld [vmem:[%s11 + $0x38] sm:$0xf]
    %v963 = vld [vmem:[%s11 + $0x3c] sm:$0xf]
    %v964 = vld [vmem:[%s11 + $0x40] sm:$0xf]
    %v965 = vld [vmem:[%s11 + $0x44] sm:$0xf]
    %v966 = vld [vmem:[%s11 + $0x48] sm:$0xf]
    %v967 = vld [vmem:[%s11 + $0x4c] sm:$0xf]
    %v968 = vld [vmem:[%s11 + $0x50] sm:$0xf]
    %v969 = vld [vmem:[%s11 + $0x54] sm:$0xf]
    %v970 = vld [vmem:[%s11 + $0x58] sm:$0xf]
    %v971 = vld [vmem:[%s11 + $0x5c] sm:$0xf]
    %v972 = vld [vmem:[%s11 + $0x60] sm:$0xf]
    %v973 = vld [vmem:[%s11 + $0x64] sm:$0xf]
    %v974 = vld [vmem:[%s11 + $0x68] sm:$0xf]
    %v975 = vld [vmem:[%s11 + $0x6c] sm:$0xf]
    %v976 = vld [vmem:[%s11 + $0x70] sm:$0xf]
    %v977 = vld [vmem:[%s11 + $0x74] sm:$0xf]
    %v978 = vld [vmem:[%s11 + $0x78] sm:$0xf]
    %v979 = vld [vmem:[%s11 + $0x7c] sm:$0xf]
    %v980 = vld [vmem:[%s11 + $0x80] sm:$0xf]
    %v981 = vld [vmem:[%s11 + $0x84] sm:$0xf]
    %v982 = vld [vmem:[%s11 + $0x88] sm:$0xf]
    %v983 = vld [vmem:[%s11 + $0x8c] sm:$0xf]
    %v984 = vld [vmem:[%s11 + $0x90] sm:$0xf]
    %v985 = vld [vmem:[%s11 + $0x94] sm:$0xf]
    %v986 = vld [vmem:[%s11 + $0x98] sm:$0xf]
    %v987 = vld [vmem:[%s11 + $0x9c] sm:$0xf]
    %v988 = vld [vmem:[%s11 + $0xa0] sm:$0xf]
    %v989 = vld [vmem:[%s11 + $0xa4] sm:$0xf]
    %v990 = vld [vmem:[%s11 + $0xa8] sm:$0xf]
    %v991 = vld [vmem:[%s11 + $0xac] sm:$0xf]
    %v992 = vld [vmem:[%s11 + $0xb0] sm:$0xf]
    %v993 = vld [vmem:[%s11 + $0xb4] sm:$0xf]
    %v994 = vld [vmem:[%s11 + $0xb8] sm:$0xf]
    %v995 = vld [vmem:[%s11 + $0xbc] sm:$0xf]
    %v996 = vld [vmem:[%s12] sm:$0x1]
    %v998 = vlaneseq
    %v999 = vshrl.u32 %v998, 7
    %v1000 = vsub.s32 0, %v999
    %v1001 = vrot.slane %v996, %v1000
    %v1051 = vunpack.c.l.b16 %v948
    %v1052 = vunpack.c.l.b16 %v949
    %v1053 = vunpack.c.l.b16 %v950
    %v1054 = vunpack.c.l.b16 %v951
    %v1055 = vunpack.c.l.b16 %v952
    %v1056 = vunpack.c.l.b16 %v953
    %v1057 = vunpack.c.l.b16 %v954
    %v1058 = vunpack.c.l.b16 %v955
    %v1059 = vunpack.c.l.b16 %v956
    %v1060 = vunpack.c.l.b16 %v957
    %v1061 = vunpack.c.l.b16 %v958
    %v1062 = vunpack.c.l.b16 %v959
    %v1063 = vunpack.c.l.b16 %v960
    %v1064 = vunpack.c.l.b16 %v961
    %v1065 = vunpack.c.l.b16 %v962
    %v1066 = vunpack.c.l.b16 %v963
    %v1067 = vunpack.c.l.b16 %v964
    %v1068 = vunpack.c.l.b16 %v965
    %v1069 = vunpack.c.l.b16 %v966
    %v1070 = vunpack.c.l.b16 %v967
    %v1071 = vunpack.c.l.b16 %v968
    %v1072 = vunpack.c.l.b16 %v969
    %v1073 = vunpack.c.l.b16 %v970
    %v1074 = vunpack.c.l.b16 %v971
    %v1075 = vunpack.c.l.b16 %v972
    %v1076 = vunpack.c.l.b16 %v973
    %v1077 = vunpack.c.l.b16 %v974
    %v1078 = vunpack.c.l.b16 %v975
    %v1079 = vunpack.c.l.b16 %v976
    %v1080 = vunpack.c.l.b16 %v977
    %v1081 = vunpack.c.l.b16 %v978
    %v1082 = vunpack.c.l.b16 %v979
    %v1083 = vunpack.c.l.b16 %v980
    %v1084 = vunpack.c.l.b16 %v981
    %v1085 = vunpack.c.l.b16 %v982
    %v1086 = vunpack.c.l.b16 %v983
    %v1087 = vunpack.c.l.b16 %v984
    %v1088 = vunpack.c.l.b16 %v985
    %v1089 = vunpack.c.l.b16 %v986
    %v1090 = vunpack.c.l.b16 %v987
    %v1091 = vunpack.c.l.b16 %v988
    %v1092 = vunpack.c.l.b16 %v989
    %v1093 = vunpack.c.l.b16 %v990
    %v1094 = vunpack.c.l.b16 %v991
    %v1095 = vunpack.c.l.b16 %v992
    %v1096 = vunpack.c.l.b16 %v993
    %v1097 = vunpack.c.l.b16 %v994
    %v1098 = vunpack.c.l.b16 %v995
    %v1099 = vpack.c.b16 %v1052, %v1051
    %v1100 = vpack.c.b16 %v1054, %v1053
    %v1101 = vpack.c.b16 %v1056, %v1055
    %v1102 = vpack.c.b16 %v1058, %v1057
    %v1103 = vpack.c.b16 %v1060, %v1059
    %v1104 = vpack.c.b16 %v1062, %v1061
    %v1105 = vpack.c.b16 %v1064, %v1063
    %v1106 = vpack.c.b16 %v1066, %v1065
    %v1107 = vpack.c.b16 %v1068, %v1067
    %v1108 = vpack.c.b16 %v1070, %v1069
    %v1109 = vpack.c.b16 %v1072, %v1071
    %v1110 = vpack.c.b16 %v1074, %v1073
    %v1111 = vpack.c.b16 %v1076, %v1075
    %v1112 = vpack.c.b16 %v1078, %v1077
    %v1113 = vpack.c.b16 %v1080, %v1079
    %v1114 = vpack.c.b16 %v1082, %v1081
    %v1115 = vpack.c.b16 %v1084, %v1083
    %v1116 = vpack.c.b16 %v1086, %v1085
    %v1117 = vpack.c.b16 %v1088, %v1087
    %v1118 = vpack.c.b16 %v1090, %v1089
    %v1119 = vpack.c.b16 %v1092, %v1091
    %v1120 = vpack.c.b16 %v1094, %v1093
    %v1121 = vpack.c.b16 %v1096, %v1095
    %v1122 = vpack.c.b16 %v1098, %v1097
    %1147 = vmatprep.subr.bf16.mxu0 0
    %1148 = vmatpush1.bf16.msra.mxu0 %v1099
    %1149 = vmatprep.subr.bf16.mxu0 0
    %1150 = vmatpush1.bf16.msra.mxu0 %v1100
    %1151 = vmatprep.subr.bf16.mxu0 0
    %1152 = vmatpush1.bf16.msra.mxu0 %v1101
    %1153 = vmatprep.subr.bf16.mxu0 0
    %1154 = vmatpush1.bf16.msra.mxu0 %v1102
    %1155 = vmatprep.subr.bf16.mxu0 0
    %1156 = vmatpush1.bf16.msra.mxu0 %v1103
    %1157 = vmatprep.subr.bf16.mxu0 0
    %1158 = vmatpush1.bf16.msra.mxu0 %v1104
    %1159 = vmatprep.subr.bf16.mxu0 0
    %1160 = vmatpush1.bf16.msra.mxu0 %v1105
    %1161 = vmatprep.subr.bf16.mxu0 0
    %1162 = vmatpush1.bf16.msra.mxu0 %v1106
    %1163 = vmatprep.subr.bf16.mxu0 0
    %1164 = vmatpush1.bf16.msra.mxu0 %v1107
    %1165 = vmatprep.subr.bf16.mxu0 0
    %1166 = vmatpush1.bf16.msra.mxu0 %v1108
    %1167 = vmatprep.subr.bf16.mxu0 0
    %1168 = vmatpush1.bf16.msra.mxu0 %v1109
    %1169 = vmatprep.subr.bf16.mxu0 0
    %1170 = vmatpush1.bf16.msra.mxu0 %v1110
    %1171 = vmatprep.subr.bf16.mxu0 0
    %1172 = vmatpush1.bf16.msra.mxu0 %v1111
    %1173 = vmatprep.subr.bf16.mxu0 0
    %1174 = vmatpush1.bf16.msra.mxu0 %v1112
    %1175 = vmatprep.subr.bf16.mxu0 0
    %1176 = vmatpush1.bf16.msra.mxu0 %v1113
    %1177 = vmatprep.subr.bf16.mxu0 0
    %1178 = vmatpush1.bf16.msra.mxu0 %v1114
    %1179 = vmatprep.mubr.bf16.mxu0 %v943
    %1180 = vmatmul.mubr.bf16.gmra.mrb[0].mxu0 %v942
    %v1181 = vpop.f32.mrb[0].mxu0
    %v1182 = vadd.f32 %v1001, %v1181
    %v1183 = vpop.f32.mrb[0].mxu0
    %v1184 = vpop.f32.mrb[0].mxu0
    %v1185 = vadd.f32 %v1001, %v1184
    %v1186 = vpop.f32.mrb[0].mxu0
    %1187 = vmatprep.mubr.bf16.mxu0 %v946
    %1188 = vmatmul.mubr.bf16.gmra.mrb[0].mxu0 %v945
    %v1189 = vpop.f32.mrb[0].mxu0
    %v1190 = vadd.f32 %v1001, %v1189
    %v1191 = vpop.f32.mrb[0].mxu0
    %v1192 = vpop.f32.mrb[0].mxu0
    %v1193 = vadd.f32 %v1001, %v1192
    %v1194 = vpop.f32.mrb[0].mxu0
    %1195 = vdwg.mxu0
    %1196 = vmatprep.subr.bf16.mxu0 0
    %1197 = vmatpush1.bf16.msra.mxu0 %v1115
    %1198 = vmatprep.subr.bf16.mxu0 0
    %1199 = vmatpush1.bf16.msra.mxu0 %v1116
    %1200 = vmatprep.subr.bf16.mxu0 0
    %1201 = vmatpush1.bf16.msra.mxu0 %v1117
    %1202 = vmatprep.subr.bf16.mxu0 0
    %1203 = vmatpush1.bf16.msra.mxu0 %v1118
    %1204 = vmatprep.subr.bf16.mxu0 0
    %1205 = vmatpush1.bf16.msra.mxu0 %v1119
    %1206 = vmatprep.subr.bf16.mxu0 0
    %1207 = vmatpush1.bf16.msra.mxu0 %v1120
    %1208 = vmatprep.subr.bf16.mxu0 0
    %1209 = vmatpush1.bf16.msra.mxu0 %v1121
    %1210 = vmatprep.subr.bf16.mxu0 0
    %1211 = vmatpush1.bf16.msra.mxu0 %v1122
    %1212 = vmatprep.subr.bf16.mxu0 0
    %1213 = vmatpush1.bf16.msra.mxu0 0
    %1214 = vmatprep.subr.bf16.mxu0 0
    %1215 = vmatpush1.bf16.msra.mxu0 0
    %1216 = vmatprep.subr.bf16.mxu0 0
    %1217 = vmatpush1.bf16.msra.mxu0 0
    %1218 = vmatprep.subr.bf16.mxu0 0
    %1219 = vmatpush1.bf16.msra.mxu0 0
    %1220 = vmatprep.subr.bf16.mxu0 0
    %1221 = vmatpush1.bf16.msra.mxu0 0
    %1222 = vmatprep.subr.bf16.mxu0 0
    %1223 = vmatpush1.bf16.msra.mxu0 0
    %1224 = vmatprep.subr.bf16.mxu0 0
    %1225 = vmatpush1.bf16.msra.mxu0 0
    %1226 = vmatprep.subr.bf16.mxu0 0
    %1227 = vmatpush1.bf16.msra.mxu0 0
    %1228 = vmatprep.mubr.bf16.mxu0 0
    %1229 = vmatmul.mubr.bf16.gmra.mrb[0].mxu0 %v944
    %v1230 = vpop.f32.mrb[0].mxu0
    %v1231 = vadd.f32 %v1182, %v1230
    %v1232 = vpop.f32.mrb[0].mxu0
    %v1233 = vpop.f32.mrb[0].mxu0
    %v1234 = vadd.f32 %v1185, %v1233
    %v1235 = vpop.f32.mrb[0].mxu0
    %1236 = vmatprep.mubr.bf16.mxu0 0
    %1237 = vmatmul.mubr.bf16.gmra.mrb[0].mxu0 %v947
    %v1238 = vpop.f32.mrb[0].mxu0
    %v1239 = vadd.f32 %v1190, %v1238
    %v1240 = vpop.f32.mrb[0].mxu0
    %v1241 = vpop.f32.mrb[0].mxu0
    %v1242 = vadd.f32 %v1193, %v1241
    %v1243 = vpop.f32.mrb[0].mxu0
    %1244 = vdwg.mxu0
    %v1245 = vmax.f32 %v1231, 0.0
    %v1246 = vmax.f32 %v1234, 0.0
    %v1247 = vmax.f32 %v1239, 0.0
    %v1248 = vmax.f32 %v1242, 0.0
    %1249 = vrot.lane.b32.xlu0 %v1245, 96
    %v1250 = vpop.permute.xlu0 %1249
    %1251 = vrot.lane.b32.xlu0 %v1246, 96
    %v1252 = vpop.permute.xlu0 %1251
    %1253 = vrot.lane.b32.xlu0 %v1247, 96
    %v1254 = vpop.permute.xlu0 %1253
    %1255 = vrot.lane.b32.xlu0 %v1248, 96
    %v1256 = vpop.permute.xlu0 %1255
    %v1257 = vmax.f32 %v1245, %v1250
    %v1258 = vmax.f32 %v1246, %v1252
    %v1259 = vmax.f32 %v1247, %v1254
    %v1260 = vmax.f32 %v1248, %v1256
    %v1261 = vrot.slane %v1257, 4
    %v1262 = vrot.slane %v1258, 4
    %v1263 = vrot.slane %v1259, 4
    %v1264 = vrot.slane %v1260, 4
    %v1265 = vsel %vm881, %v1263, %v1264
    %v1266 = vsel %vm881, %v1262, %v1263
    %v1267 = vsel %vm881, %v1261, %v1262
    %v1268 = vsel %vm881, %v1264, %v1261
    %v1269 = vmax.f32 %v1257, %v1267
    %v1270 = vmax.f32 %v1258, %v1266
    %v1271 = vmax.f32 %v1259, %v1265
    %v1272 = vmax.f32 %v1260, %v1268
    %v1273 = vpack.c.bf16 %v1270, %v1269
    %v1274 = vpack.c.bf16 %v1272, %v1271
    %v1275 = vld [vmem:[%s13] sm:$0x1]
    %vm1276 = vcmask 261120
    %v1278 = vsel %vm1276, %v1275, 0
    %1280 = vmatprep.subr.bf16.mxu0 0
    %1281 = vmatpush1.bf16.msra.mxu0 %v1273
    %1282 = vmatprep.subr.bf16.mxu0 0
    %1283 = vmatpush1.bf16.msra.mxu0 %v1274
    %1284 = vmatprep.subr.bf16.mxu0 0
    %1285 = vmatpush1.bf16.msra.mxu0 0
    %1286 = vmatprep.subr.bf16.mxu0 0
    %1287 = vmatpush1.bf16.msra.mxu0 0
    %1288 = vmatprep.subr.bf16.mxu0 0
    %1289 = vmatpush1.bf16.msra.mxu0 0
    %1290 = vmatprep.subr.bf16.mxu0 0
    %1291 = vmatpush1.bf16.msra.mxu0 0
    %1292 = vmatprep.subr.bf16.mxu0 0
    %1293 = vmatpush1.bf16.msra.mxu0 0
    %1294 = vmatprep.subr.bf16.mxu0 0
    %1295 = vmatpush1.bf16.msra.mxu0 0
    %1296 = vmatprep.subr.bf16.mxu0 0
    %1297 = vmatpush1.bf16.msra.mxu0 0
    %1298 = vmatprep.subr.bf16.mxu0 0
    %1299 = vmatpush1.bf16.msra.mxu0 0
    %1300 = vmatprep.subr.bf16.mxu0 0
    %1301 = vmatpush1.bf16.msra.mxu0 0
    %1302 = vmatprep.subr.bf16.mxu0 0
    %1303 = vmatpush1.bf16.msra.mxu0 0
    %1304 = vmatprep.subr.bf16.mxu0 0
    %1305 = vmatpush1.bf16.msra.mxu0 0
    %1306 = vmatprep.subr.bf16.mxu0 0
    %1307 = vmatpush1.bf16.msra.mxu0 0
    %1308 = vmatprep.subr.bf16.mxu0 0
    %1309 = vmatpush1.bf16.msra.mxu0 0
    %1310 = vmatprep.subr.bf16.mxu0 0
    %1311 = vmatpush1.bf16.msra.mxu0 0
    %1312 = vmatprep.mubr.bf16.mxu0 0
    %1313 = vmatmul.mubr.bf16.gmra.mrb[0].mxu0 %v1278
    %v1314 = vpop.f32.mrb[0].mxu0
    %v1315 = vadd.f32 0.0, %v1314
    %v1316 = vpop.f32.mrb[0].mxu0
    %v1317 = vpop.f32.mrb[0].mxu0
    %v1318 = vpop.f32.mrb[0].mxu0
    %1319 = vdwg.mxu0
    %v1320 = vpack.c.bf16 %v1315, %v1315
    %v1321 = vld [vmem:[%s14] sm:$0xf]
    %v1322 = vld [vmem:[%s14 + $0x4] sm:$0xf]
    %v1323 = vld [vmem:[%s14 + $0x8] sm:$0xf]
    %v1324 = vld [vmem:[%s14 + $0xc] sm:$0xf]
    %v1325 = vld [vmem:[%s14 + $0x10] sm:$0xf]
    %v1326 = vld [vmem:[%s14 + $0x14] sm:$0xf]
    %v1327 = vld [vmem:[%s14 + $0x18] sm:$0xf]
    %v1328 = vld [vmem:[%s14 + $0x1c] sm:$0xf]
    %v1329 = vld [vmem:[%s14 + $0x20] sm:$0xf]
    %v1330 = vld [vmem:[%s14 + $0x24] sm:$0xf]
    %v1331 = vld [vmem:[%s14 + $0x28] sm:$0xf]
    %v1332 = vld [vmem:[%s14 + $0x2c] sm:$0xf]
    %v1333 = vld [vmem:[%s14 + $0x30] sm:$0xf]
    %v1334 = vld [vmem:[%s14 + $0x34] sm:$0xf]
    %v1335 = vld [vmem:[%s14 + $0x38] sm:$0xf]
    %v1336 = vld [vmem:[%s14 + $0x3c] sm:$0xf]
    %s1337 = scalar_lea.vmem %s13, 1
    %v1338 = vld [vmem:[%s1337] sm:$0x1]
    %v1340 = vsel %vm1276, %v1338, 0
    %1342 = vmatprep.subr.bf16.mxu0 0
    %1343 = vmatpush1.bf16.msra.mxu0 %v1273
    %1344 = vmatprep.subr.bf16.mxu0 0
    %1345 = vmatpush1.bf16.msra.mxu0 %v1274
    %1346 = vmatprep.subr.bf16.mxu0 0
    %1347 = vmatpush1.bf16.msra.mxu0 0
    %1348 = vmatprep.subr.bf16.mxu0 0
    %1349 = vmatpush1.bf16.msra.mxu0 0
    %1350 = vmatprep.subr.bf16.mxu0 0
    %1351 = vmatpush1.bf16.msra.mxu0 0
    %1352 = vmatprep.subr.bf16.mxu0 0
    %1353 = vmatpush1.bf16.msra.mxu0 0
    %1354 = vmatprep.subr.bf16.mxu0 0
    %1355 = vmatpush1.bf16.msra.mxu0 0
    %1356 = vmatprep.subr.bf16.mxu0 0
    %1357 = vmatpush1.bf16.msra.mxu0 0
    %1358 = vmatprep.subr.bf16.mxu0 0
    %1359 = vmatpush1.bf16.msra.mxu0 0
    %1360 = vmatprep.subr.bf16.mxu0 0
    %1361 = vmatpush1.bf16.msra.mxu0 0
    %1362 = vmatprep.subr.bf16.mxu0 0
    %1363 = vmatpush1.bf16.msra.mxu0 0
    %1364 = vmatprep.subr.bf16.mxu0 0
    %1365 = vmatpush1.bf16.msra.mxu0 0
    %1366 = vmatprep.subr.bf16.mxu0 0
    %1367 = vmatpush1.bf16.msra.mxu0 0
    %1368 = vmatprep.subr.bf16.mxu0 0
    %1369 = vmatpush1.bf16.msra.mxu0 0
    %1370 = vmatprep.subr.bf16.mxu0 0
    %1371 = vmatpush1.bf16.msra.mxu0 0
    %1372 = vmatprep.subr.bf16.mxu0 0
    %1373 = vmatpush1.bf16.msra.mxu0 0
    %1374 = vmatprep.mubr.bf16.mxu0 0
    %1375 = vmatmul.mubr.bf16.gmra.mrb[0].mxu0 %v1340
    %v1376 = vpop.f32.mrb[0].mxu0
    %v1377 = vadd.f32 0.0, %v1376
    %v1378 = vpop.f32.mrb[0].mxu0
    %v1379 = vpop.f32.mrb[0].mxu0
    %v1380 = vpop.f32.mrb[0].mxu0
    %1381 = vdwg.mxu0
    %v1382 = vpack.c.bf16 %v1377, %v1377
    %s1383 = scalar_lea.vmem %s14, 64
    %v1384 = vld [vmem:[%s1383] sm:$0xf]
    %v1385 = vld [vmem:[%s1383 + $0x4] sm:$0xf]
    %v1386 = vld [vmem:[%s1383 + $0x8] sm:$0xf]
    %v1387 = vld [vmem:[%s1383 + $0xc] sm:$0xf]
    %v1388 = vld [vmem:[%s1383 + $0x10] sm:$0xf]
    %v1389 = vld [vmem:[%s1383 + $0x14] sm:$0xf]
    %v1390 = vld [vmem:[%s1383 + $0x18] sm:$0xf]
    %v1391 = vld [vmem:[%s1383 + $0x1c] sm:$0xf]
    %v1392 = vld [vmem:[%s1383 + $0x20] sm:$0xf]
    %v1393 = vld [vmem:[%s1383 + $0x24] sm:$0xf]
    %v1394 = vld [vmem:[%s1383 + $0x28] sm:$0xf]
    %v1395 = vld [vmem:[%s1383 + $0x2c] sm:$0xf]
    %v1396 = vld [vmem:[%s1383 + $0x30] sm:$0xf]
    %v1397 = vld [vmem:[%s1383 + $0x34] sm:$0xf]
    %v1398 = vld [vmem:[%s1383 + $0x38] sm:$0xf]
    %v1399 = vld [vmem:[%s1383 + $0x3c] sm:$0xf]
    %v1416 = vunpack.c.l.b16 %v1384
    %v1417 = vunpack.c.l.b16 %v1385
    %v1418 = vunpack.c.l.b16 %v1386
    %v1419 = vunpack.c.l.b16 %v1387
    %v1420 = vunpack.c.l.b16 %v1388
    %v1421 = vunpack.c.l.b16 %v1389
    %v1422 = vunpack.c.l.b16 %v1390
    %v1423 = vunpack.c.l.b16 %v1391
    %v1424 = vunpack.c.l.b16 %v1392
    %v1425 = vunpack.c.l.b16 %v1393
    %v1426 = vunpack.c.l.b16 %v1394
    %v1427 = vunpack.c.l.b16 %v1395
    %v1428 = vunpack.c.l.b16 %v1396
    %v1429 = vunpack.c.l.b16 %v1397
    %v1430 = vunpack.c.l.b16 %v1398
    %v1431 = vunpack.c.l.b16 %v1399
    %v1432 = vpack.c.b16 %v1417, %v1416
    %v1433 = vpack.c.b16 %v1419, %v1418
    %v1434 = vpack.c.b16 %v1421, %v1420
    %v1435 = vpack.c.b16 %v1423, %v1422
    %v1436 = vpack.c.b16 %v1425, %v1424
    %v1437 = vpack.c.b16 %v1427, %v1426
    %v1438 = vpack.c.b16 %v1429, %v1428
    %v1439 = vpack.c.b16 %v1431, %v1430
    %1448 = vmatprep.subr.bf16.mxu0 0
    %1449 = vmatpush1.bf16.msra.mxu0 %v1432
    %1450 = vmatprep.subr.bf16.mxu0 0
    %1451 = vmatpush1.bf16.msra.mxu0 %v1433
    %1452 = vmatprep.subr.bf16.mxu0 0
    %1453 = vmatpush1.bf16.msra.mxu0 %v1434
    %1454 = vmatprep.subr.bf16.mxu0 0
    %1455 = vmatpush1.bf16.msra.mxu0 %v1435
    %1456 = vmatprep.subr.bf16.mxu0 0
    %1457 = vmatpush1.bf16.msra.mxu0 %v1436
    %1458 = vmatprep.subr.bf16.mxu0 0
    %1459 = vmatpush1.bf16.msra.mxu0 %v1437
    %1460 = vmatprep.subr.bf16.mxu0 0
    %1461 = vmatpush1.bf16.msra.mxu0 %v1438
    %1462 = vmatprep.subr.bf16.mxu0 0
    %1463 = vmatpush1.bf16.msra.mxu0 %v1439
    %1464 = vmatprep.subr.bf16.mxu0 0
    %1465 = vmatpush1.bf16.msra.mxu0 0
    %1466 = vmatprep.subr.bf16.mxu0 0
    %1467 = vmatpush1.bf16.msra.mxu0 0
    %1468 = vmatprep.subr.bf16.mxu0 0
    %1469 = vmatpush1.bf16.msra.mxu0 0
    %1470 = vmatprep.subr.bf16.mxu0 0
    %1471 = vmatpush1.bf16.msra.mxu0 0
    %1472 = vmatprep.subr.bf16.mxu0 0
    %1473 = vmatpush1.bf16.msra.mxu0 0
    %1474 = vmatprep.subr.bf16.mxu0 0
    %1475 = vmatpush1.bf16.msra.mxu0 0
    %1476 = vmatprep.subr.bf16.mxu0 0
    %1477 = vmatpush1.bf16.msra.mxu0 0
    %1478 = vmatprep.subr.bf16.mxu0 0
    %1479 = vmatpush1.bf16.msra.mxu0 0
    %1480 = vmatprep.mubr.bf16.mxu0 0
    %1481 = vmatmul.mubr.bf16.gmra.mrb[0].mxu0 %v1382
    %v1482 = vpop.f32.mrb[0].mxu0
    %v1483 = vadd.f32 0.0, %v1482
    %v1484 = vpop.f32.mrb[0].mxu0
    %v1485 = vpop.f32.mrb[0].mxu0
    %v1486 = vpop.f32.mrb[0].mxu0
    %1487 = vdwg.mxu0
    %v1504 = vunpack.c.l.b16 %v1321
    %v1505 = vunpack.c.l.b16 %v1322
    %v1506 = vunpack.c.l.b16 %v1323
    %v1507 = vunpack.c.l.b16 %v1324
    %v1508 = vunpack.c.l.b16 %v1325
    %v1509 = vunpack.c.l.b16 %v1326
    %v1510 = vunpack.c.l.b16 %v1327
    %v1511 = vunpack.c.l.b16 %v1328
    %v1512 = vunpack.c.l.b16 %v1329
    %v1513 = vunpack.c.l.b16 %v1330
    %v1514 = vunpack.c.l.b16 %v1331
    %v1515 = vunpack.c.l.b16 %v1332
    %v1516 = vunpack.c.l.b16 %v1333
    %v1517 = vunpack.c.l.b16 %v1334
    %v1518 = vunpack.c.l.b16 %v1335
    %v1519 = vunpack.c.l.b16 %v1336
    %v1520 = vpack.c.b16 %v1505, %v1504
    %v1521 = vpack.c.b16 %v1507, %v1506
    %v1522 = vpack.c.b16 %v1509, %v1508
    %v1523 = vpack.c.b16 %v1511, %v1510
    %v1524 = vpack.c.b16 %v1513, %v1512
    %v1525 = vpack.c.b16 %v1515, %v1514
    %v1526 = vpack.c.b16 %v1517, %v1516
    %v1527 = vpack.c.b16 %v1519, %v1518
    %1536 = vmatprep.subr.bf16.mxu0 0
    %1537 = vmatpush1.bf16.msra.mxu0 %v1520
    %1538 = vmatprep.subr.bf16.mxu0 0
    %1539 = vmatpush1.bf16.msra.mxu0 %v1521
    %1540 = vmatprep.subr.bf16.mxu0 0
    %1541 = vmatpush1.bf16.msra.mxu0 %v1522
    %1542 = vmatprep.subr.bf16.mxu0 0
    %1543 = vmatpush1.bf16.msra.mxu0 %v1523
    %1544 = vmatprep.subr.bf16.mxu0 0
    %1545 = vmatpush1.bf16.msra.mxu0 %v1524
    %1546 = vmatprep.subr.bf16.mxu0 0
    %1547 = vmatpush1.bf16.msra.mxu0 %v1525
    %1548 = vmatprep.subr.bf16.mxu0 0
    %1549 = vmatpush1.bf16.msra.mxu0 %v1526
    %1550 = vmatprep.subr.bf16.mxu0 0
    %1551 = vmatpush1.bf16.msra.mxu0 %v1527
    %1552 = vmatprep.subr.bf16.mxu0 0
    %1553 = vmatpush1.bf16.msra.mxu0 0
    %1554 = vmatprep.subr.bf16.mxu0 0
    %1555 = vmatpush1.bf16.msra.mxu0 0
    %1556 = vmatprep.subr.bf16.mxu0 0
    %1557 = vmatpush1.bf16.msra.mxu0 0
    %1558 = vmatprep.subr.bf16.mxu0 0
    %1559 = vmatpush1.bf16.msra.mxu0 0
    %1560 = vmatprep.subr.bf16.mxu0 0
    %1561 = vmatpush1.bf16.msra.mxu0 0
    %1562 = vmatprep.subr.bf16.mxu0 0
    %1563 = vmatpush1.bf16.msra.mxu0 0
    %1564 = vmatprep.subr.bf16.mxu0 0
    %1565 = vmatpush1.bf16.msra.mxu0 0
    %1566 = vmatprep.subr.bf16.mxu0 0
    %1567 = vmatpush1.bf16.msra.mxu0 0
    %1568 = vmatprep.mubr.bf16.mxu0 0
    %1569 = vmatmul.mubr.bf16.gmra.mrb[0].mxu0 %v1320
    %v1570 = vpop.f32.mrb[0].mxu0
    %v1571 = vadd.f32 %v1483, %v1570
    %v1572 = vpop.f32.mrb[0].mxu0
    %v1573 = vpop.f32.mrb[0].mxu0
    %v1574 = vpop.f32.mrb[0].mxu0
    %1575 = vdwg.mxu0
    %v1576 = vld [vmem:[%s15] sm:$0x1]
    %v1578 = vlaneseq
    %v1579 = vshrl.u32 %v1578, 7
    %v1580 = vsub.s32 0, %v1579
    %v1581 = vrot.slane %v1576, %v1580
    %v1583 = vadd.f32 %v1571, %v1581
    %v1584 = vmax.f32 %v1583, 0.0
    %v1585 = vpack.c.bf16 %v1584, %v1584
    %v1586 = vld [vmem:[%s16] sm:$0xf]
    %v1587 = vld [vmem:[%s16 + $0x4] sm:$0xf]
    %v1588 = vld [vmem:[%s16 + $0x8] sm:$0xf]
    %v1589 = vld [vmem:[%s16 + $0xc] sm:$0xf]
    %v1590 = vld [vmem:[%s16 + $0x10] sm:$0xf]
    %v1591 = vld [vmem:[%s16 + $0x14] sm:$0xf]
    %v1592 = vld [vmem:[%s16 + $0x18] sm:$0xf]
    %v1593 = vld [vmem:[%s16 + $0x1c] sm:$0xf]
    %v1594 = vld [vmem:[%s16 + $0x20] sm:$0xf]
    %v1595 = vld [vmem:[%s16 + $0x24] sm:$0xf]
    %v1596 = vld [vmem:[%s16 + $0x28] sm:$0xf]
    %v1597 = vld [vmem:[%s16 + $0x2c] sm:$0xf]
    %v1598 = vld [vmem:[%s16 + $0x30] sm:$0xf]
    %v1599 = vld [vmem:[%s16 + $0x34] sm:$0xf]
    %v1600 = vld [vmem:[%s16 + $0x38] sm:$0xf]
    %v1601 = vld [vmem:[%s16 + $0x3c] sm:$0xf]
    %v1602 = vld [vmem:[%s17] sm:$0x1]
    %v1604 = vlaneseq
    %v1605 = vshrl.u32 %v1604, 7
    %v1606 = vsub.s32 0, %v1605
    %v1607 = vrot.slane %v1602, %v1606
    %v1625 = vunpack.c.l.b16 %v1586
    %v1626 = vunpack.c.l.b16 %v1587
    %v1627 = vunpack.c.l.b16 %v1588
    %v1628 = vunpack.c.l.b16 %v1589
    %v1629 = vunpack.c.l.b16 %v1590
    %v1630 = vunpack.c.l.b16 %v1591
    %v1631 = vunpack.c.l.b16 %v1592
    %v1632 = vunpack.c.l.b16 %v1593
    %v1633 = vunpack.c.l.b16 %v1594
    %v1634 = vunpack.c.l.b16 %v1595
    %v1635 = vunpack.c.l.b16 %v1596
    %v1636 = vunpack.c.l.b16 %v1597
    %v1637 = vunpack.c.l.b16 %v1598
    %v1638 = vunpack.c.l.b16 %v1599
    %v1639 = vunpack.c.l.b16 %v1600
    %v1640 = vunpack.c.l.b16 %v1601
    %v1641 = vpack.c.b16 %v1626, %v1625
    %v1642 = vpack.c.b16 %v1628, %v1627
    %v1643 = vpack.c.b16 %v1630, %v1629
    %v1644 = vpack.c.b16 %v1632, %v1631
    %v1645 = vpack.c.b16 %v1634, %v1633
    %v1646 = vpack.c.b16 %v1636, %v1635
    %v1647 = vpack.c.b16 %v1638, %v1637
    %v1648 = vpack.c.b16 %v1640, %v1639
    %1657 = vmatprep.subr.bf16.mxu0 0
    %1658 = vmatpush1.bf16.msra.mxu0 %v1641
    %1659 = vmatprep.subr.bf16.mxu0 0
    %1660 = vmatpush1.bf16.msra.mxu0 %v1642
    %1661 = vmatprep.subr.bf16.mxu0 0
    %1662 = vmatpush1.bf16.msra.mxu0 %v1643
    %1663 = vmatprep.subr.bf16.mxu0 0
    %1664 = vmatpush1.bf16.msra.mxu0 %v1644
    %1665 = vmatprep.subr.bf16.mxu0 0
    %1666 = vmatpush1.bf16.msra.mxu0 %v1645
    %1667 = vmatprep.subr.bf16.mxu0 0
    %1668 = vmatpush1.bf16.msra.mxu0 %v1646
    %1669 = vmatprep.subr.bf16.mxu0 0
    %1670 = vmatpush1.bf16.msra.mxu0 %v1647
    %1671 = vmatprep.subr.bf16.mxu0 0
    %1672 = vmatpush1.bf16.msra.mxu0 %v1648
    %1673 = vmatprep.subr.bf16.mxu0 0
    %1674 = vmatpush1.bf16.msra.mxu0 0
    %1675 = vmatprep.subr.bf16.mxu0 0
    %1676 = vmatpush1.bf16.msra.mxu0 0
    %1677 = vmatprep.subr.bf16.mxu0 0
    %1678 = vmatpush1.bf16.msra.mxu0 0
    %1679 = vmatprep.subr.bf16.mxu0 0
    %1680 = vmatpush1.bf16.msra.mxu0 0
    %1681 = vmatprep.subr.bf16.mxu0 0
    %1682 = vmatpush1.bf16.msra.mxu0 0
    %1683 = vmatprep.subr.bf16.mxu0 0
    %1684 = vmatpush1.bf16.msra.mxu0 0
    %1685 = vmatprep.subr.bf16.mxu0 0
    %1686 = vmatpush1.bf16.msra.mxu0 0
    %1687 = vmatprep.subr.bf16.mxu0 0
    %1688 = vmatpush1.bf16.msra.mxu0 0
    %1689 = vmatprep.mubr.bf16.mxu0 0
    %1690 = vmatmul.mubr.bf16.gmra.mrb[0].mxu0 %v1585
    %v1691 = vpop.f32.mrb[0].mxu0
    %v1692 = vadd.f32 %v1607, %v1691
    %v1693 = vpop.f32.mrb[0].mxu0
    %v1694 = vpop.f32.mrb[0].mxu0
    %v1695 = vpop.f32.mrb[0].mxu0
    %1696 = vdwg.mxu0
    %vm1697 = vcmask 74752
    %1698 = vst.msk [vmem:[#allocation2] sm:$0x3] %vm1697, %v1692
    // Predicated region
    $region74: #{simple_cnn_forward.1} parent=1 // pred_check
      _
    $region75: #{simple_cnn_forward.1} parent=1 // pred_check_branch
      %1700 = sbr.rel (0) target = $region77
    $region76: #{simple_cnn_forward.1} parent=1 // pred_region
      %s1702 = ssub.s32 32, 32
      %1703 = vsyncadd [#allocation3], %s1702
      %s1705 = sshll.u32 [#allocation2], 4
      %s1706 = int_to_ptr.vmem [resolvable:$true] %s1705
      %1708 = dma.vmem_to_hbm [thread:$0]  %s1706, 32, %s18, [#allocation3]
    $region77: #{simple_cnn_forward.1} parent=1 // pred_fallthru
      _
    // Predicated region
    $region78: #{simple_cnn_forward.1} parent=1 // pred_check
      _
    $region79: #{simple_cnn_forward.1} parent=1 // pred_check_branch
      %1710 = sbr.rel (0) target = $region81
    $region80: #{simple_cnn_forward.1} parent=1 // pred_region
      %1711 = dma.done [#allocation3], 32
    $region81: #{simple_cnn_forward.1} parent=1 // pred_fallthru
      _
    %1712 = vsyncpa [#allocation3], 1

</llo_original>
